<compile_context>
chip_gen: v5e
topology: v5e:2x2
jax: 0.10.0
libtpu: 0.0.40
codegen_flags: <defaults>
</compile_context>

<pallas_src>
import math

import numpy as np
import jax
import jax.numpy as jnp
from jax import lax
from jax.experimental import pallas as pl
from jax.experimental.pallas import tpu as pltpu

CHANNEL = 32
HEAD = 4
BN_EPS = 1e-5
M_TILE = 512          # key-axis tile for the flash-style online softmax
N_BLOCK = 512         # query/point-axis block (lane-dense, grid-parallel)
NEG_INF = -1e30


# ----------------------------------------------------------------------------
# Kernel 1 factory: attention + fused convs + BN partial statistics
# ----------------------------------------------------------------------------
def _make_attention_kernel(head, mt, num_mt, m_valid, need_mask):
    def kernel(d1_ref, d2_ref, wv_ref, hmask_ref,
               wq1_ref, bq1_ref, wkv_ref, bkv_ref, wbc_ref, bfold_ref,
               u_ref, stats_ref):
        f32, bf16 = jnp.float32, jnp.bfloat16
        d1 = d1_ref[0]                              # (C, Nb) bf16
        C, Nb = d1.shape
        hd = C // head
        HNb = head * Nb

        # Stacked d1 projection: rows [0:C] = scaled q, rows [C:3C] = Wc1_left @ d1.
        p1 = jnp.dot(wq1_ref[...], d1, preferred_element_type=f32) + bq1_ref[...]
        q = p1[:C]                                  # (C, Nb) f32
        u_d1 = p1[C:]                               # (2C, Nb) f32

        # Block-diagonal query: all HEAD score matmuls collapse into one K=C dot.
        q_bd = jnp.concatenate(
            [q * hmask_ref[:, h:h + 1] for h in range(head)],
            axis=1).astype(bf16)                    # (C, HEAD*Nb)

        def m_tile_body(t, carry):
            m_run, l_run, acc = carry
            start = t * mt
            if not isinstance(start, int):
                start = pl.multiple_of(start, mt)
            d2_t = d2_ref[0, :, pl.ds(start, mt)]   # (C, mt) bf16
            wv_t = wv_ref[0, :, pl.ds(start, mt)]   # (1, mt) f32

            kv = jnp.dot(wkv_ref[...], d2_t, preferred_element_type=f32) + bkv_ref[...]
            k_t = kv[:C].astype(bf16)               # (C, mt)
            v_t = kv[C:] * wv_t                     # (C, mt) f32

            # Scores for all heads at once: (mt, HEAD*Nb), contraction K = C.
            s = lax.dot_general(k_t, q_bd, (((0,), (0,)), ((), ())),
                                preferred_element_type=f32)
            if need_mask:
                m_idx = lax.broadcasted_iota(jnp.int32, (mt, 1), 0) + start
                s = s + jnp.where(m_idx < m_valid, 0.0, NEG_INF)

            m_t = jnp.max(s, axis=0, keepdims=True)           # (1, HNb)
            m_new = jnp.maximum(m_run, m_t)
            alpha = jnp.exp(m_run - m_new)
            p = jnp.exp(s - m_new)                            # (mt, HNb) f32
            l_new = alpha * l_run + jnp.sum(p, axis=0, keepdims=True)
            p_bf = p.astype(bf16)
            pv = jnp.concatenate(
                [jnp.dot(v_t[h * hd:(h + 1) * hd].astype(bf16),
                         p_bf[:, h * Nb:(h + 1) * Nb],
                         preferred_element_type=f32)
                 for h in range(head)], axis=1)               # (hd, HNb)
            acc_new = alpha * acc + pv
            return m_new, l_new, acc_new

        init = (jnp.full((1, HNb), NEG_INF, f32),
                jnp.zeros((1, HNb), f32),
                jnp.zeros((hd, HNb), f32))
        if num_mt == 1:
            m_run, l_run, acc = m_tile_body(0, init)
        else:
            m_run, l_run, acc = lax.fori_loop(0, num_mt, m_tile_body, init, unroll=2)

        # Deferred normalization on the EUP; then reassemble heads along channels.
        inv_l = pl.reciprocal(l_run, approx=True)             # (1, HNb)
        att_bd = acc * inv_l                                   # (hd, HNb)
        att = jnp.concatenate(
            [att_bd[:, h * Nb:(h + 1) * Nb] for h in range(head)],
            axis=0).astype(bf16)                               # (C, Nb)

        # u = Wc1_left@d1 + (Wc1_right@Wmh)@att + (bc1 + Wc1_right@bmh)
        u = (u_d1 + jnp.dot(wbc_ref[...], att, preferred_element_type=f32)
             + bfold_ref[...])                                 # (2C, Nb) f32

        u_ref[0] = u.astype(u_ref.dtype)
        stats_ref[0, 0] = jnp.concatenate(
            [jnp.sum(u, axis=1, keepdims=True),
             jnp.sum(u * u, axis=1, keepdims=True)], axis=1)   # (2C, 2)

    return kernel


# ----------------------------------------------------------------------------
# Kernel 2: fused BN (precomputed scale/shift) + ReLU + second conv + residual
# ----------------------------------------------------------------------------
def _bn_relu_conv_kernel(d1_ref, u_ref, bnss_ref, wc2_ref, bc2_ref, out_ref):
    f32 = jnp.float32
    u = u_ref[0].astype(f32)                                   # (2C, Nb)
    scale = bnss_ref[:, 0:1]
    shift = bnss_ref[:, 1:2]
    r = jnp.maximum(u * scale + shift, 0.0).astype(jnp.bfloat16)
    y = jnp.dot(wc2_ref[...], r, preferred_element_type=f32) + bc2_ref[...]
    out_ref[0] = d1_ref[0] + y


# ----------------------------------------------------------------------------
# Wrapper
# ----------------------------------------------------------------------------
def attention_propagation(desc1, desc2, params, weight_v=None, *,
                          m_tile=M_TILE, n_block=N_BLOCK):
    f32, bf16 = jnp.float32, jnp.bfloat16
    B, C, N = desc1.shape
    M = desc2.shape[-1]
    C2 = 2 * C
    head = HEAD
    hd = C // head

    # N blocking: largest lane-dense divisor of N, else the full N.
    nb = next((c for c in (n_block, 512, 256, 128)
               if 0 < c <= N and N % c == 0 and c % 128 == 0), N)
    num_nb = N // nb

    # M tiling (pad keys up to a tile multiple; padded keys masked in-kernel).
    if M <= m_tile:
        mt, num_mt, Mp = M, 1, M
    else:
        mt = m_tile
        num_mt = -(-M // mt)
        Mp = num_mt * mt
    need_mask = Mp != M

    if weight_v is None:
        weight_v = jnp.ones((B, M), f32)
    d2 = desc2
    wv = weight_v.astype(f32)
    if Mp != M:
        d2 = jnp.pad(d2, ((0, 0), (0, 0), (0, Mp - M)))
        wv = jnp.pad(wv, ((0, 0), (0, Mp - M)))
    d1_bf = desc1.astype(bf16)
    d2_bf = d2.astype(bf16)
    wv3 = wv.reshape(B, 1, Mp)

    # ---- weight prep: fold scale, stack projections, compose mh_filter into cat_filter.
    col = lambda x: jnp.asarray(x, f32).reshape(-1, 1)
    scale_q = 1.0 / math.sqrt(hd)
    Wq = jnp.asarray(params["Wq"], f32)
    Wk = jnp.asarray(params["Wk"], f32)
    Wv = jnp.asarray(params["Wv"], f32)
    Wmh = jnp.asarray(params["Wmh"], f32)
    Wc1 = jnp.asarray(params["Wc1"], f32)
    Wc1a, Wc1b = Wc1[:, :C], Wc1[:, C:]

    Wq1 = jnp.concatenate([Wq * scale_q, Wc1a], axis=0).astype(bf16)        # (3C, C)
    bq1 = jnp.concatenate([col(params["bq"]) * scale_q,
                           jnp.zeros((C2, 1), f32)], axis=0)                # (3C, 1)
    Wkv = jnp.concatenate([Wk, Wv], axis=0).astype(bf16)                    # (2C, C)
    bkv = jnp.concatenate([col(params["bk"]), col(params["bv"])], axis=0)   # (2C, 1)
    Wbc = jnp.dot(Wc1b, Wmh).astype(bf16)                                   # (2C, C)
    bfold = col(params["bc1"]) + jnp.dot(Wc1b, col(params["bmh"]))          # (2C, 1)
    Wc2_bf = jnp.asarray(params["Wc2"], f32).astype(bf16)                   # (C, 2C)
    bc2 = col(params["bc2"])

    # Per-head row mask used to build the block-diagonal query in-kernel.
    hmask_np = np.zeros((C, head), np.float32)
    for h in range(head):
        hmask_np[h * hd:(h + 1) * hd, h] = 1.0
    hmask = jnp.asarray(hmask_np)

    def blk(c, n):
        return pl.BlockSpec((1, c, n), lambda b, j: (b, 0, j))

    def full_m(c):
        return pl.BlockSpec((1, c, Mp), lambda b, j: (b, 0, 0))

    def shared(a):
        return pl.BlockSpec(a.shape, lambda b, j: (0,) * a.ndim)

    kernel1 = _make_attention_kernel(head, mt, num_mt, M, need_mask)

    u_bf, stats = pl.pallas_call(
        kernel1,
        out_shape=(jax.ShapeDtypeStruct((B, C2, N), bf16),
                   jax.ShapeDtypeStruct((B, num_nb, C2, 2), f32)),
        grid=(B, num_nb),
        in_specs=[
            blk(C, nb),            # desc1 (bf16)
            full_m(C),             # desc2 (bf16, M-padded, resident across N blocks)
            full_m(1),             # weight_v
            shared(hmask),
            shared(Wq1), shared(bq1),
            shared(Wkv), shared(bkv),
            shared(Wbc), shared(bfold),
        ],
        out_specs=(
            blk(C2, nb),
            pl.BlockSpec((1, 1, C2, 2), lambda b, j: (b, j, 0, 0)),
        ),
        compiler_params=pltpu.CompilerParams(
            dimension_semantics=("parallel", "parallel"),
            vmem_limit_bytes=48 * 1024 * 1024),
    )(d1_bf, d2_bf, wv3, hmask, Wq1, bq1, Wkv, bkv, Wbc, bfold)

    # ---- BatchNorm finalize (tiny cross-batch/block reduction) -> fused scale/shift.
    totals = jnp.sum(stats, axis=(0, 1))                       # (2C, 2)
    count = float(B * N)
    mean = totals[:, 0:1] / count
    var = jnp.maximum(totals[:, 1:2] / count - mean * mean, 0.0)
    istd = lax.rsqrt(var + BN_EPS)
    bn_scale = col(params["gamma"]) * istd
    bn_shift = col(params["beta"]) - mean * bn_scale
    bn_ss = jnp.concatenate([bn_scale, bn_shift], axis=1)      # (2C, 2)

    out = pl.pallas_call(
        _bn_relu_conv_kernel,
        out_shape=jax.ShapeDtypeStruct((B, C, N), desc1.dtype),
        grid=(B, num_nb),
        in_specs=[
            blk(C, nb),            # desc1 (f32 residual)
            blk(C2, nb),           # u (bf16)
            shared(bn_ss),
            shared(Wc2_bf), shared(bc2),
        ],
        out_specs=blk(C, nb),
        compiler_params=pltpu.CompilerParams(
            dimension_semantics=("parallel", "parallel")),
    )(desc1.astype(f32), u_bf, bn_ss, Wc2_bf, bc2)
    return out


# ----------------------------------------------------------------------------
# Deterministic parameter init (kernel_size=1 Conv1d weights stored as 2-D).
# ----------------------------------------------------------------------------
def init_params(key, channel):
    c2 = 2 * channel
    keys = jax.random.split(key, 16)

    def w(k, o, i):
        return (0.1 * jax.random.normal(k, (o, i))).astype(jnp.float32)

    def b(k, o):
        return (0.1 * jax.random.normal(k, (o,))).astype(jnp.float32)

    return {
        "Wq": w(keys[0], channel, channel),  "bq": b(keys[1], channel),
        "Wk": w(keys[2], channel, channel),  "bk": b(keys[3], channel),
        "Wv": w(keys[4], channel, channel),  "bv": b(keys[5], channel),
        "Wmh": w(keys[6], channel, channel), "bmh": b(keys[7], channel),
        "Wc1": w(keys[8], c2, c2),           "bc1": b(keys[9], c2),
        "gamma": jnp.ones((c2,), jnp.float32),   # SyncBatchNorm default affine
        "beta": jnp.zeros((c2,), jnp.float32),
        "Wc2": w(keys[10], channel, c2),     "bc2": b(keys[11], channel),
    }


# ----------------------------------------------------------------------------
# Pure-JAX f32 reference (mirrors the PyTorch forward, training-mode BatchNorm).
# ----------------------------------------------------------------------------
def reference(desc1, desc2, params, weight_v):
    P = lax.Precision.HIGHEST
    B, C, N = desc1.shape
    M = desc2.shape[-1]
    head_dim = C // HEAD

    def conv(W, bias, x):
        return jnp.einsum("oc,bcn->bon", W, x, precision=P) + bias[None, :, None]

    q = conv(params["Wq"], params["bq"], desc1).reshape(B, HEAD, head_dim, N)
    k = conv(params["Wk"], params["bk"], desc2).reshape(B, HEAD, head_dim, M)
    v = conv(params["Wv"], params["bv"], desc2).reshape(B, HEAD, head_dim, M)
    v = v * weight_v.reshape(B, 1, 1, M)

    score = jax.nn.softmax(
        jnp.einsum("bhdn,bhdm->bhnm", q, k, precision=P) / math.sqrt(head_dim), axis=-1)
    add_value = jnp.einsum("bhnm,bhdm->bhdn", score, v, precision=P).reshape(B, C, N)
    add_value = conv(params["Wmh"], params["bmh"], add_value)

    cat = jnp.concatenate([desc1, add_value], axis=1)
    u = conv(params["Wc1"], params["bc1"], cat)
    mean = u.mean(axis=(0, 2), keepdims=True)
    var = ((u - mean) ** 2).mean(axis=(0, 2), keepdims=True)
    un = (u - mean) / jnp.sqrt(var + BN_EPS)
    un = un * params["gamma"][None, :, None] + params["beta"][None, :, None]
    r = jnp.maximum(un, 0.0)
    y = conv(params["Wc2"], params["bc2"], r)
    return desc1 + y


if __name__ == "__main__":
    key = jax.random.PRNGKey(0)
    kd1, kd2, kwv, kp, kd3, kd4, kwv2 = jax.random.split(key, 7)
    params = init_params(kp, CHANNEL)

    # Case 1: tiny shapes (single N block, single M tile — no padding/masking path).
    B, N, M = 2, 16, 12
    desc1 = jax.random.normal(kd1, (B, CHANNEL, N), jnp.float32)
    desc2 = jax.random.normal(kd2, (B, CHANNEL, M), jnp.float32)
    weight_v = jax.random.uniform(kwv, (B, M), jnp.float32)
    out = jax.block_until_ready(attention_propagation(desc1, desc2, params, weight_v))
    ref = reference(desc1, desc2, params, weight_v)
    np.testing.assert_allclose(np.asarray(out), np.asarray(ref), rtol=5e-2, atol=5e-2)

    # Case 2: exercises the N-block grid, the fori_loop M tiling and key masking.
    B2, N2, M2 = 2, 256, 320
    desc1b = jax.random.normal(kd3, (B2, CHANNEL, N2), jnp.float32)
    desc2b = jax.random.normal(kd4, (B2, CHANNEL, M2), jnp.float32)
    weight_vb = jax.random.uniform(kwv2, (B2, M2), jnp.float32)
    outb = jax.block_until_ready(
        attention_propagation(desc1b, desc2b, params, weight_vb,
                              m_tile=128, n_block=128))
    refb = reference(desc1b, desc2b, params, weight_vb)
    np.testing.assert_allclose(np.asarray(outb), np.asarray(refb), rtol=5e-2, atol=5e-2)

    print("KERNEL_OK")
</pallas_src>

<mosaic_0001>
module attributes {stable_mosaic.version = 11 : i64} {
  func.func @kernel(%arg0: i32, %arg1: i32, %arg2: memref<1x32x16xbf16, #tpu.memory_space<vmem>>, %arg3: memref<1x32x12xbf16, #tpu.memory_space<vmem>>, %arg4: memref<1x1x12xf32, #tpu.memory_space<vmem>>, %arg5: memref<32x4xf32, #tpu.memory_space<vmem>>, %arg6: memref<96x32xbf16, #tpu.memory_space<vmem>>, %arg7: memref<96x1xf32, #tpu.memory_space<vmem>>, %arg8: memref<64x32xbf16, #tpu.memory_space<vmem>>, %arg9: memref<64x1xf32, #tpu.memory_space<vmem>>, %arg10: memref<64x32xbf16, #tpu.memory_space<vmem>>, %arg11: memref<64x1xf32, #tpu.memory_space<vmem>>, %arg12: memref<1x64x16xbf16, #tpu.memory_space<vmem>>, %arg13: memref<1x1x64x2xf32, #tpu.memory_space<vmem>>) attributes {dimension_semantics = [#tpu.dimension_semantics<parallel>, #tpu.dimension_semantics<parallel>], iteration_bounds = array<i64: 2, 1>, scalar_prefetch = 0 : i64, scratch_operands = 0 : i64, tpu.core_type = #tpu.core_type<tc>, window_params = [{transform_indices = @transform_0, window_bounds = array<i64: 1, 32, 16>}, {transform_indices = @transform_1, window_bounds = array<i64: 1, 32, 12>}, {transform_indices = @transform_2, window_bounds = array<i64: 1, 1, 12>}, {pipeline_mode = #tpu.pipeline_mode<synchronous>, transform_indices = @transform_3, window_bounds = array<i64: 32, 4>}, {pipeline_mode = #tpu.pipeline_mode<synchronous>, transform_indices = @transform_4, window_bounds = array<i64: 96, 32>}, {pipeline_mode = #tpu.pipeline_mode<synchronous>, transform_indices = @transform_5, window_bounds = array<i64: 96, 1>}, {pipeline_mode = #tpu.pipeline_mode<synchronous>, transform_indices = @transform_6, window_bounds = array<i64: 64, 32>}, {pipeline_mode = #tpu.pipeline_mode<synchronous>, transform_indices = @transform_7, window_bounds = array<i64: 64, 1>}, {pipeline_mode = #tpu.pipeline_mode<synchronous>, transform_indices = @transform_8, window_bounds = array<i64: 64, 32>}, {pipeline_mode = #tpu.pipeline_mode<synchronous>, transform_indices = @transform_9, window_bounds = array<i64: 64, 1>}, {transform_indices = @transform_10, window_bounds = array<i64: 1, 64, 16>}, {transform_indices = @transform_11, window_bounds = array<i64: 1, 1, 64, 2>}]} {
    %c0 = arith.constant 0 : index
    %c0_0 = arith.constant 0 : index
    %c0_1 = arith.constant 0 : index
    %0 = vector.load %arg2[%c0, %c0_0, %c0_1] : memref<1x32x16xbf16, #tpu.memory_space<vmem>>, vector<1x32x16xbf16>
    %1 = vector.shape_cast %0 : vector<1x32x16xbf16> to vector<32x16xbf16>
    %c0_2 = arith.constant 0 : index
    %c0_3 = arith.constant 0 : index
    %2 = vector.load %arg6[%c0_2, %c0_3] : memref<96x32xbf16, #tpu.memory_space<vmem>>, vector<96x32xbf16>
    %cst = arith.constant dense<0.000000e+00> : vector<96x16xf32>
    %3 = tpu.matmul %2, %1, %cst {dimension_numbers = #tpu.dot_dimension_numbers<[1], [0], [0], [1], [0, 0, 1, 1], [], []>} : vector<96x32xbf16>, vector<32x16xbf16>, vector<96x16xf32> -> vector<96x16xf32>
    %c0_4 = arith.constant 0 : index
    %c0_5 = arith.constant 0 : index
    %4 = vector.load %arg7[%c0_4, %c0_5] : memref<96x1xf32, #tpu.memory_space<vmem>>, vector<96x1xf32>
    %5 = vector.broadcast %4 : vector<96x1xf32> to vector<96x16xf32>
    %6 = arith.addf %3, %5 : vector<96x16xf32>
    %7 = vector.extract_strided_slice %6 {offsets = [0, 0], sizes = [32, 16], strides = [1, 1]} : vector<96x16xf32> to vector<32x16xf32>
    %8 = vector.extract_strided_slice %6 {offsets = [32, 0], sizes = [64, 16], strides = [1, 1]} : vector<96x16xf32> to vector<64x16xf32>
    %c0_6 = arith.constant 0 : index
    %c0_7 = arith.constant 0 : index
    %9 = vector.load %arg5[%c0_6, %c0_7] : memref<32x4xf32, #tpu.memory_space<vmem>>, vector<32x1xf32>
    %10 = vector.broadcast %9 : vector<32x1xf32> to vector<32x16xf32>
    %11 = arith.mulf %7, %10 : vector<32x16xf32>
    %c0_8 = arith.constant 0 : index
    %c1 = arith.constant 1 : index
    %12 = vector.load %arg5[%c0_8, %c1] : memref<32x4xf32, #tpu.memory_space<vmem>>, vector<32x1xf32>
    %13 = vector.broadcast %12 : vector<32x1xf32> to vector<32x16xf32>
    %14 = arith.mulf %7, %13 : vector<32x16xf32>
    %c0_9 = arith.constant 0 : index
    %c2 = arith.constant 2 : index
    %15 = vector.load %arg5[%c0_9, %c2] : memref<32x4xf32, #tpu.memory_space<vmem>>, vector<32x1xf32>
    %16 = vector.broadcast %15 : vector<32x1xf32> to vector<32x16xf32>
    %17 = arith.mulf %7, %16 : vector<32x16xf32>
    %c0_10 = arith.constant 0 : index
    %c3 = arith.constant 3 : index
    %18 = vector.load %arg5[%c0_10, %c3] : memref<32x4xf32, #tpu.memory_space<vmem>>, vector<32x1xf32>
    %19 = vector.broadcast %18 : vector<32x1xf32> to vector<32x16xf32>
    %20 = arith.mulf %7, %19 : vector<32x16xf32>
    %21 = tpu.concatenate %11, %14, %17, %20 in 1 : vector<32x16xf32>, vector<32x16xf32>, vector<32x16xf32>, vector<32x16xf32> -> vector<32x64xf32>
    %22 = arith.truncf %21 : vector<32x64xf32> to vector<32x64xbf16>
    %cst_11 = arith.constant -1.000000e+30 : f32
    %23 = vector.broadcast %cst_11 : f32 to vector<1x64xf32>
    %cst_12 = arith.constant 0.000000e+00 : f32
    %24 = vector.broadcast %cst_12 : f32 to vector<1x64xf32>
    %cst_13 = arith.constant 0.000000e+00 : f32
    %25 = vector.broadcast %cst_13 : f32 to vector<8x64xf32>
    %c0_14 = arith.constant 0 : index
    %c0_15 = arith.constant 0 : index
    %c0_16 = arith.constant 0 : index
    %26 = vector.load %arg3[%c0_14, %c0_15, %c0_16] : memref<1x32x12xbf16, #tpu.memory_space<vmem>>, vector<1x32x12xbf16>
    %27 = vector.shape_cast %26 : vector<1x32x12xbf16> to vector<32x12xbf16>
    %c0_17 = arith.constant 0 : index
    %c0_18 = arith.constant 0 : index
    %c0_19 = arith.constant 0 : index
    %28 = vector.load %arg4[%c0_17, %c0_18, %c0_19] : memref<1x1x12xf32, #tpu.memory_space<vmem>>, vector<1x1x12xf32>
    %29 = vector.shape_cast %28 : vector<1x1x12xf32> to vector<1x12xf32>
    %c0_20 = arith.constant 0 : index
    %c0_21 = arith.constant 0 : index
    %30 = vector.load %arg8[%c0_20, %c0_21] : memref<64x32xbf16, #tpu.memory_space<vmem>>, vector<64x32xbf16>
    %cst_22 = arith.constant dense<0.000000e+00> : vector<64x12xf32>
    %31 = tpu.matmul %30, %27, %cst_22 {dimension_numbers = #tpu.dot_dimension_numbers<[1], [0], [0], [1], [0, 0, 1, 1], [], []>} : vector<64x32xbf16>, vector<32x12xbf16>, vector<64x12xf32> -> vector<64x12xf32>
    %c0_23 = arith.constant 0 : index
    %c0_24 = arith.constant 0 : index
    %32 = vector.load %arg9[%c0_23, %c0_24] : memref<64x1xf32, #tpu.memory_space<vmem>>, vector<64x1xf32>
    %33 = vector.broadcast %32 : vector<64x1xf32> to vector<64x12xf32>
    %34 = arith.addf %31, %33 : vector<64x12xf32>
    %35 = vector.extract_strided_slice %34 {offsets = [0, 0], sizes = [32, 12], strides = [1, 1]} : vector<64x12xf32> to vector<32x12xf32>
    %36 = arith.truncf %35 : vector<32x12xf32> to vector<32x12xbf16>
    %37 = vector.extract_strided_slice %34 {offsets = [32, 0], sizes = [32, 12], strides = [1, 1]} : vector<64x12xf32> to vector<32x12xf32>
    %38 = vector.broadcast %29 : vector<1x12xf32> to vector<32x12xf32>
    %39 = arith.mulf %37, %38 : vector<32x12xf32>
    %cst_25 = arith.constant dense<0.000000e+00> : vector<12x64xf32>
    %40 = tpu.matmul %36, %22, %cst_25 {dimension_numbers = #tpu.dot_dimension_numbers<[0], [0], [1], [1], [0, 1, 1, 1], [], []>} : vector<32x12xbf16>, vector<32x64xbf16>, vector<12x64xf32> -> vector<12x64xf32>
    %cst_26 = arith.constant dense<0xFF800000> : vector<64xf32>
    %41 = vector.multi_reduction <maximumf>, %40, %cst_26 [0] : vector<12x64xf32> to vector<64xf32>
    %42 = vector.shape_cast %41 : vector<64xf32> to vector<1x64xf32>
    %43 = arith.maximumf %23, %42 : vector<1x64xf32>
    %44 = arith.subf %23, %43 : vector<1x64xf32>
    %45 = math.exp %44 : vector<1x64xf32>
    %46 = vector.broadcast %43 : vector<1x64xf32> to vector<12x64xf32>
    %47 = arith.subf %40, %46 : vector<12x64xf32>
    %48 = math.exp %47 : vector<12x64xf32>
    %49 = arith.mulf %45, %24 : vector<1x64xf32>
    %cst_27 = arith.constant dense<0.000000e+00> : vector<64xf32>
    %50 = vector.multi_reduction <add>, %48, %cst_27 [0] : vector<12x64xf32> to vector<64xf32>
    %51 = vector.shape_cast %50 : vector<64xf32> to vector<1x64xf32>
    %52 = arith.addf %49, %51 : vector<1x64xf32>
    %53 = arith.truncf %48 : vector<12x64xf32> to vector<12x64xbf16>
    %54 = vector.extract_strided_slice %39 {offsets = [0, 0], sizes = [8, 12], strides = [1, 1]} : vector<32x12xf32> to vector<8x12xf32>
    %55 = arith.truncf %54 : vector<8x12xf32> to vector<8x12xbf16>
    %56 = vector.extract_strided_slice %53 {offsets = [0, 0], sizes = [12, 16], strides = [1, 1]} : vector<12x64xbf16> to vector<12x16xbf16>
    %cst_28 = arith.constant dense<0.000000e+00> : vector<8x16xf32>
    %57 = tpu.matmul %55, %56, %cst_28 {dimension_numbers = #tpu.dot_dimension_numbers<[1], [0], [0], [1], [0, 0, 1, 1], [], []>} : vector<8x12xbf16>, vector<12x16xbf16>, vector<8x16xf32> -> vector<8x16xf32>
    %58 = vector.extract_strided_slice %39 {offsets = [8, 0], sizes = [8, 12], strides = [1, 1]} : vector<32x12xf32> to vector<8x12xf32>
    %59 = arith.truncf %58 : vector<8x12xf32> to vector<8x12xbf16>
    %60 = vector.extract_strided_slice %53 {offsets = [0, 16], sizes = [12, 16], strides = [1, 1]} : vector<12x64xbf16> to vector<12x16xbf16>
    %cst_29 = arith.constant dense<0.000000e+00> : vector<8x16xf32>
    %61 = tpu.matmul %59, %60, %cst_29 {dimension_numbers = #tpu.dot_dimension_numbers<[1], [0], [0], [1], [0, 0, 1, 1], [], []>} : vector<8x12xbf16>, vector<12x16xbf16>, vector<8x16xf32> -> vector<8x16xf32>
    %62 = vector.extract_strided_slice %39 {offsets = [16, 0], sizes = [8, 12], strides = [1, 1]} : vector<32x12xf32> to vector<8x12xf32>
    %63 = arith.truncf %62 : vector<8x12xf32> to vector<8x12xbf16>
    %64 = vector.extract_strided_slice %53 {offsets = [0, 32], sizes = [12, 16], strides = [1, 1]} : vector<12x64xbf16> to vector<12x16xbf16>
    %cst_30 = arith.constant dense<0.000000e+00> : vector<8x16xf32>
    %65 = tpu.matmul %63, %64, %cst_30 {dimension_numbers = #tpu.dot_dimension_numbers<[1], [0], [0], [1], [0, 0, 1, 1], [], []>} : vector<8x12xbf16>, vector<12x16xbf16>, vector<8x16xf32> -> vector<8x16xf32>
    %66 = vector.extract_strided_slice %39 {offsets = [24, 0], sizes = [8, 12], strides = [1, 1]} : vector<32x12xf32> to vector<8x12xf32>
    %67 = arith.truncf %66 : vector<8x12xf32> to vector<8x12xbf16>
    %68 = vector.extract_strided_slice %53 {offsets = [0, 48], sizes = [12, 16], strides = [1, 1]} : vector<12x64xbf16> to vector<12x16xbf16>
    %cst_31 = arith.constant dense<0.000000e+00> : vector<8x16xf32>
    %69 = tpu.matmul %67, %68, %cst_31 {dimension_numbers = #tpu.dot_dimension_numbers<[1], [0], [0], [1], [0, 0, 1, 1], [], []>} : vector<8x12xbf16>, vector<12x16xbf16>, vector<8x16xf32> -> vector<8x16xf32>
    %70 = tpu.concatenate %57, %61, %65, %69 in 1 : vector<8x16xf32>, vector<8x16xf32>, vector<8x16xf32>, vector<8x16xf32> -> vector<8x64xf32>
    %71 = vector.broadcast %45 : vector<1x64xf32> to vector<8x64xf32>
    %72 = arith.mulf %71, %25 : vector<8x64xf32>
    %73 = arith.addf %72, %70 : vector<8x64xf32>
    %74 = tpu.reciprocal %52 {approx = true} : vector<1x64xf32> -> vector<1x64xf32>
    %75 = vector.broadcast %74 : vector<1x64xf32> to vector<8x64xf32>
    %76 = arith.mulf %73, %75 : vector<8x64xf32>
    %77 = vector.extract_strided_slice %76 {offsets = [0, 0], sizes = [8, 16], strides = [1, 1]} : vector<8x64xf32> to vector<8x16xf32>
    %78 = vector.extract_strided_slice %76 {offsets = [0, 16], sizes = [8, 16], strides = [1, 1]} : vector<8x64xf32> to vector<8x16xf32>
    %79 = vector.extract_strided_slice %76 {offsets = [0, 32], sizes = [8, 16], strides = [1, 1]} : vector<8x64xf32> to vector<8x16xf32>
    %80 = vector.extract_strided_slice %76 {offsets = [0, 48], sizes = [8, 16], strides = [1, 1]} : vector<8x64xf32> to vector<8x16xf32>
    %81 = tpu.concatenate %77, %78, %79, %80 in 0 : vector<8x16xf32>, vector<8x16xf32>, vector<8x16xf32>, vector<8x16xf32> -> vector<32x16xf32>
    %82 = arith.truncf %81 : vector<32x16xf32> to vector<32x16xbf16>
    %c0_32 = arith.constant 0 : index
    %c0_33 = arith.constant 0 : index
    %83 = vector.load %arg10[%c0_32, %c0_33] : memref<64x32xbf16, #tpu.memory_space<vmem>>, vector<64x32xbf16>
    %cst_34 = arith.constant dense<0.000000e+00> : vector<64x16xf32>
    %84 = tpu.matmul %83, %82, %cst_34 {dimension_numbers = #tpu.dot_dimension_numbers<[1], [0], [0], [1], [0, 0, 1, 1], [], []>} : vector<64x32xbf16>, vector<32x16xbf16>, vector<64x16xf32> -> vector<64x16xf32>
    %85 = arith.addf %8, %84 : vector<64x16xf32>
    %c0_35 = arith.constant 0 : index
    %c0_36 = arith.constant 0 : index
    %86 = vector.load %arg11[%c0_35, %c0_36] : memref<64x1xf32, #tpu.memory_space<vmem>>, vector<64x1xf32>
    %87 = vector.broadcast %86 : vector<64x1xf32> to vector<64x16xf32>
    %88 = arith.addf %85, %87 : vector<64x16xf32>
    %89 = arith.truncf %88 : vector<64x16xf32> to vector<64x16xbf16>
    %c0_37 = arith.constant 0 : index
    %c0_38 = arith.constant 0 : index
    %c0_39 = arith.constant 0 : index
    %90 = vector.load %arg12[%c0_37, %c0_38, %c0_39] : memref<1x64x16xbf16, #tpu.memory_space<vmem>>, vector<1x64x16xbf16>
    %91 = vector.shape_cast %90 : vector<1x64x16xbf16> to vector<64x16xbf16>
    %92 = vector.shape_cast %89 : vector<64x16xbf16> to vector<1x64x16xbf16>
    tpu.vector_store %arg12[%c0_37, %c0_38, %c0_39], %92 {strides = array<i32>} : memref<1x64x16xbf16, #tpu.memory_space<vmem>>, vector<1x64x16xbf16>,
    %cst_40 = arith.constant dense<0.000000e+00> : vector<64xf32>
    %93 = vector.multi_reduction <add>, %88, %cst_40 [1] : vector<64x16xf32> to vector<64xf32>
    %94 = vector.shape_cast %93 : vector<64xf32> to vector<64x1xf32>
    %95 = arith.mulf %88, %88 : vector<64x16xf32>
    %cst_41 = arith.constant dense<0.000000e+00> : vector<64xf32>
    %96 = vector.multi_reduction <add>, %95, %cst_41 [1] : vector<64x16xf32> to vector<64xf32>
    %97 = vector.shape_cast %96 : vector<64xf32> to vector<64x1xf32>
    %98 = tpu.concatenate %94, %97 in 1 : vector<64x1xf32>, vector<64x1xf32> -> vector<64x2xf32>
    %c0_42 = arith.constant 0 : index
    %c0_43 = arith.constant 0 : index
    %c0_44 = arith.constant 0 : index
    %c0_45 = arith.constant 0 : index
    %99 = vector.load %arg13[%c0_42, %c0_43, %c0_44, %c0_45] : memref<1x1x64x2xf32, #tpu.memory_space<vmem>>, vector<1x1x64x2xf32>
    %100 = vector.shape_cast %99 : vector<1x1x64x2xf32> to vector<64x2xf32>
    %101 = vector.shape_cast %98 : vector<64x2xf32> to vector<1x1x64x2xf32>
    tpu.vector_store %arg13[%c0_42, %c0_43, %c0_44, %c0_45], %101 {strides = array<i32>} : memref<1x1x64x2xf32, #tpu.memory_space<vmem>>, vector<1x1x64x2xf32>,
    return
  }
  func.func @transform_0(%arg0: i32, %arg1: i32) -> (i32, i32, i32) {
    %c0_i32 = arith.constant 0 : i32
    %c0_i32_0 = arith.constant 0 : i32
    return %arg0, %c0_i32, %arg1 : i32, i32, i32
  }
  func.func @transform_1(%arg0: i32, %arg1: i32) -> (i32, i32, i32) {
    %c0_i32 = arith.constant 0 : i32
    %c0_i32_0 = arith.constant 0 : i32
    %c0_i32_1 = arith.constant 0 : i32
    return %arg0, %c0_i32, %c0_i32_0 : i32, i32, i32
  }
  func.func @transform_2(%arg0: i32, %arg1: i32) -> (i32, i32, i32) {
    %c0_i32 = arith.constant 0 : i32
    %c0_i32_0 = arith.constant 0 : i32
    %c0_i32_1 = arith.constant 0 : i32
    return %arg0, %c0_i32, %c0_i32_0 : i32, i32, i32
  }
  func.func @transform_3(%arg0: i32, %arg1: i32) -> (i32, i32) {
    %c0_i32 = arith.constant 0 : i32
    %c0_i32_0 = arith.constant 0 : i32
    %c0_i32_1 = arith.constant 0 : i32
    return %c0_i32, %c0_i32_0 : i32, i32
  }
  func.func @transform_4(%arg0: i32, %arg1: i32) -> (i32, i32) {
    %c0_i32 = arith.constant 0 : i32
    %c0_i32_0 = arith.constant 0 : i32
    %c0_i32_1 = arith.constant 0 : i32
    return %c0_i32, %c0_i32_0 : i32, i32
  }
  func.func @transform_5(%arg0: i32, %arg1: i32) -> (i32, i32) {
    %c0_i32 = arith.constant 0 : i32
    %c0_i32_0 = arith.constant 0 : i32
    %c0_i32_1 = arith.constant 0 : i32
    return %c0_i32, %c0_i32_0 : i32, i32
  }
  func.func @transform_6(%arg0: i32, %arg1: i32) -> (i32, i32) {
    %c0_i32 = arith.constant 0 : i32
    %c0_i32_0 = arith.constant 0 : i32
    %c0_i32_1 = arith.constant 0 : i32
    return %c0_i32, %c0_i32_0 : i32, i32
  }
  func.func @transform_7(%arg0: i32, %arg1: i32) -> (i32, i32) {
    %c0_i32 = arith.constant 0 : i32
    %c0_i32_0 = arith.constant 0 : i32
    %c0_i32_1 = arith.constant 0 : i32
    return %c0_i32, %c0_i32_0 : i32, i32
  }
  func.func @transform_8(%arg0: i32, %arg1: i32) -> (i32, i32) {
    %c0_i32 = arith.constant 0 : i32
    %c0_i32_0 = arith.constant 0 : i32
    %c0_i32_1 = arith.constant 0 : i32
    return %c0_i32, %c0_i32_0 : i32, i32
  }
  func.func @transform_9(%arg0: i32, %arg1: i32) -> (i32, i32) {
    %c0_i32 = arith.constant 0 : i32
    %c0_i32_0 = arith.constant 0 : i32
    %c0_i32_1 = arith.constant 0 : i32
    return %c0_i32, %c0_i32_0 : i32, i32
  }
  func.func @transform_10(%arg0: i32, %arg1: i32) -> (i32, i32, i32) {
    %c0_i32 = arith.constant 0 : i32
    %c0_i32_0 = arith.constant 0 : i32
    return %arg0, %c0_i32, %arg1 : i32, i32, i32
  }
  func.func @transform_11(%arg0: i32, %arg1: i32) -> (i32, i32, i32, i32) {
    %c0_i32 = arith.constant 0 : i32
    %c0_i32_0 = arith.constant 0 : i32
    %c0_i32_1 = arith.constant 0 : i32
    return %arg0, %arg1, %c0_i32, %c0_i32_0 : i32, i32, i32, i32
  }
}

</mosaic_0001>

<llo_original>
// kernel: tpu_custom_call.1
$region0: #{tpu_custom_call.1}
  #allocation0 [shape = 'u32[]', space=smem, size = 0x4, offset = 0x4, fixed_abs, tag = 'smem constant byte address 0x4 - core index']
  #allocation1 [shape = 'u32[72,128]{1,0:T(1,128)}', space=vmem, size = 0x9000, scoped, tag = 'internal scratch']
  %s0 = inlined_call_operand.vmem [shape: bf16[2,32,16], index: 0, kind: input, shape index: {}]
  %s1 = inlined_call_operand.vmem [shape: bf16[2,32,12], index: 1, kind: input, shape index: {}]
  %s2 = inlined_call_operand.vmem [shape: f32[2,1,12], index: 2, kind: input, shape index: {}]
  %s3 = inlined_call_operand.vmem [shape: f32[32,4], index: 3, kind: input, shape index: {}]
  %s4 = inlined_call_operand.vmem [shape: bf16[96,32], index: 4, kind: input, shape index: {}]
  %s5 = inlined_call_operand.vmem [shape: f32[96,1], index: 5, kind: input, shape index: {}]
  %s6 = inlined_call_operand.vmem [shape: bf16[64,32], index: 6, kind: input, shape index: {}]
  %s7 = inlined_call_operand.vmem [shape: f32[64,1], index: 7, kind: input, shape index: {}]
  %s8 = inlined_call_operand.vmem [shape: bf16[64,32], index: 8, kind: input, shape index: {}]
  %s9 = inlined_call_operand.vmem [shape: f32[64,1], index: 9, kind: input, shape index: {}]
  %s10 = inlined_call_operand.vmem [shape: bf16[2,64,16], index: 10, kind: output, shape index: {0}]
  %s11 = inlined_call_operand.vmem [shape: f32[2,1,64,2], index: 11, kind: output, shape index: {1}]
  %12 = xla_tuple %s10, %s11
  %s13 = sld [smem:[#allocation0]]
  $region81: #{tpu_custom_call.1} parent=0
    _
  %s15 = ssub.s32 1, %s13
  %s16 = scalar_select 0, %s15, %s13
  loop: start=0, step=1, limit=4
  $region2: #{tpu_custom_call.1} parent=0 // loop_pre_header
    _
  $region3: #{tpu_custom_call.1} parent=0 // loop_header
    %s18 = sphi 0, %s22
    %p19 = scmp.ge.s32.totalorder %s18, 4
    %s25 = sphi 0, %s37
    %s26 = sphi 0, %s33
    %s27 = sphi 0, %s25
    %s28 = sphi 0, %s26
    %s29 = sphi 0, %s27
    %s30 = sphi 0, %s28
    %s42 = sphi 0, %s44
    %s45 = sphi 0, %s42
    %s46 = sphi 0, %s45
    %s62 = sphi 0, %s46
    %s68 = sphi 0, %s70
    %s71 = sphi 0, %s68
    %s72 = sphi 0, %s71
    %s88 = sphi 0, %s72
    %s94 = sphi 0, %s96
    %s97 = sphi 0, %s94
    %s98 = sphi 0, %s97
    %s114 = sphi 0, %s98
    %s118 = sphi 0, %s118
    %s120 = sphi 0, %s118
    %s121 = sphi 0, %s120
    %s135 = sphi 0, %s121
    %s139 = sphi 0, %s139
    %s141 = sphi 0, %s139
    %s142 = sphi 0, %s141
    %s156 = sphi 0, %s142
    %s160 = sphi 0, %s160
    %s162 = sphi 0, %s160
    %s163 = sphi 0, %s162
    %s177 = sphi 0, %s163
    %s181 = sphi 0, %s181
    %s183 = sphi 0, %s181
    %s184 = sphi 0, %s183
    %s198 = sphi 0, %s184
    %s202 = sphi 0, %s202
    %s204 = sphi 0, %s202
    %s205 = sphi 0, %s204
    %s219 = sphi 0, %s205
    %s223 = sphi 0, %s223
    %s225 = sphi 0, %s223
    %s226 = sphi 0, %s225
    %s240 = sphi 0, %s226
    %s244 = sphi 0, %s244
    %s246 = sphi 0, %s244
    %s247 = sphi 0, %s246
    %s261 = sphi 0, %s247
    %s269 = sphi 0, %s271
    %s272 = sphi 0, %s269
    %s273 = sphi 0, %s272
    %s289 = sphi 0, %s273
    %s297 = sphi 0, %s299
    %s300 = sphi 0, %s297
    %s301 = sphi 0, %s300
    %s317 = sphi 0, %s301
  $region4: #{tpu_custom_call.1} parent=0 // loop_header_branch
    %21 = sbr.rel (%p19) target = $region8
  $region5: #{tpu_custom_call.1} parent=0 // loop_body
    %s23 = ssub.s32 %s18, 1
    %s24 = ssub.s32 %s18, 2
    %s31 = sadd.s32 1, %s26
    %p32 = scmp.ge.s32.totalorder %s31, 1
    %s33 = scalar_select %p32, 0, %s31
    %s34 = sadd.s32 1, %s25
    %s35 = scalar_select %p32, %s34, %s25
    %p36 = scmp.ge.s32.totalorder %s35, 2
    %s37 = scalar_select %p36, 0, %s35
    %s38 = ssub.s32 %s25, %s37
    %s39 = ssub.s32 %s26, %s33
    %s40 = sor.u32 %s38, %s39
    %p41 = scmp.eq.s32.totalorder %s40, 0
    %s43 = sadd.s32 %s42, 1
    %s44 = scalar_select %p41, %s42, %s43
    %p47 = pneg %p41
    %p48 = scmp.eq.s32.totalorder %s18, 1
    %p49 = por %p47, %p48
    %p50 = scmp.ne.s32.totalorder %s42, %s45
    %p51 = scmp.eq.s32.totalorder %s18, 0
    %p52 = por %p50, %p51
    %p53 = scmp.ne.s32.totalorder %s42, %s45
    %p54 = scmp.eq.s32.totalorder %s23, 1
    %p55 = por %p53, %p54
    %p56 = scmp.ne.s32.totalorder %s45, %s46
    %p57 = scmp.eq.s32.totalorder %s23, 0
    %p58 = por %p56, %p57
    %p59 = scmp.ne.s32.totalorder %s45, %s46
    %p60 = scmp.eq.s32.totalorder %s24, 1
    %p61 = por %p59, %p60
    %p63 = scmp.ne.s32.totalorder %s46, %s62
    %p64 = scmp.eq.s32.totalorder %s24, 0
    %p65 = por %p63, %p64
    %s66 = ssub.s32 %s25, %s37
    %p67 = scmp.eq.s32.totalorder %s66, 0
    %s69 = sadd.s32 %s68, 1
    %s70 = scalar_select %p67, %s68, %s69
    %p73 = pneg %p67
    %p74 = scmp.eq.s32.totalorder %s18, 1
    %p75 = por %p73, %p74
    %p76 = scmp.ne.s32.totalorder %s68, %s71
    %p77 = scmp.eq.s32.totalorder %s18, 0
    %p78 = por %p76, %p77
    %p79 = scmp.ne.s32.totalorder %s68, %s71
    %p80 = scmp.eq.s32.totalorder %s23, 1
    %p81 = por %p79, %p80
    %p82 = scmp.ne.s32.totalorder %s71, %s72
    %p83 = scmp.eq.s32.totalorder %s23, 0
    %p84 = por %p82, %p83
    %p85 = scmp.ne.s32.totalorder %s71, %s72
    %p86 = scmp.eq.s32.totalorder %s24, 1
    %p87 = por %p85, %p86
    %p89 = scmp.ne.s32.totalorder %s72, %s88
    %p90 = scmp.eq.s32.totalorder %s24, 0
    %p91 = por %p89, %p90
    %s92 = ssub.s32 %s25, %s37
    %p93 = scmp.eq.s32.totalorder %s92, 0
    %s95 = sadd.s32 %s94, 1
    %s96 = scalar_select %p93, %s94, %s95
    %p99 = pneg %p93
    %p100 = scmp.eq.s32.totalorder %s18, 1
    %p101 = por %p99, %p100
    %p102 = scmp.ne.s32.totalorder %s94, %s97
    %p103 = scmp.eq.s32.totalorder %s18, 0
    %p104 = por %p102, %p103
    %p105 = scmp.ne.s32.totalorder %s94, %s97
    %p106 = scmp.eq.s32.totalorder %s23, 1
    %p107 = por %p105, %p106
    %p108 = scmp.ne.s32.totalorder %s97, %s98
    %p109 = scmp.eq.s32.totalorder %s23, 0
    %p110 = por %p108, %p109
    %p111 = scmp.ne.s32.totalorder %s97, %s98
    %p112 = scmp.eq.s32.totalorder %s24, 1
    %p113 = por %p111, %p112
    %p115 = scmp.ne.s32.totalorder %s98, %s114
    %p116 = scmp.eq.s32.totalorder %s24, 0
    %p117 = por %p115, %p116
    %s119 = sadd.s32 %s118, 1
    %p122 = scmp.eq.s32.totalorder %s18, 1
    %p123 = scmp.ne.s32.totalorder %s118, %s120
    %p124 = scmp.eq.s32.totalorder %s18, 0
    %p125 = por %p123, %p124
    %p126 = scmp.ne.s32.totalorder %s118, %s120
    %p127 = scmp.eq.s32.totalorder %s23, 1
    %p128 = por %p126, %p127
    %p129 = scmp.ne.s32.totalorder %s120, %s121
    %p130 = scmp.eq.s32.totalorder %s23, 0
    %p131 = por %p129, %p130
    %p132 = scmp.ne.s32.totalorder %s120, %s121
    %p133 = scmp.eq.s32.totalorder %s24, 1
    %p134 = por %p132, %p133
    %p136 = scmp.ne.s32.totalorder %s121, %s135
    %p137 = scmp.eq.s32.totalorder %s24, 0
    %p138 = por %p136, %p137
    %s140 = sadd.s32 %s139, 1
    %p143 = scmp.eq.s32.totalorder %s18, 1
    %p144 = scmp.ne.s32.totalorder %s139, %s141
    %p145 = scmp.eq.s32.totalorder %s18, 0
    %p146 = por %p144, %p145
    %p147 = scmp.ne.s32.totalorder %s139, %s141
    %p148 = scmp.eq.s32.totalorder %s23, 1
    %p149 = por %p147, %p148
    %p150 = scmp.ne.s32.totalorder %s141, %s142
    %p151 = scmp.eq.s32.totalorder %s23, 0
    %p152 = por %p150, %p151
    %p153 = scmp.ne.s32.totalorder %s141, %s142
    %p154 = scmp.eq.s32.totalorder %s24, 1
    %p155 = por %p153, %p154
    %p157 = scmp.ne.s32.totalorder %s142, %s156
    %p158 = scmp.eq.s32.totalorder %s24, 0
    %p159 = por %p157, %p158
    %s161 = sadd.s32 %s160, 1
    %p164 = scmp.eq.s32.totalorder %s18, 1
    %p165 = scmp.ne.s32.totalorder %s160, %s162
    %p166 = scmp.eq.s32.totalorder %s18, 0
    %p167 = por %p165, %p166
    %p168 = scmp.ne.s32.totalorder %s160, %s162
    %p169 = scmp.eq.s32.totalorder %s23, 1
    %p170 = por %p168, %p169
    %p171 = scmp.ne.s32.totalorder %s162, %s163
    %p172 = scmp.eq.s32.totalorder %s23, 0
    %p173 = por %p171, %p172
    %p174 = scmp.ne.s32.totalorder %s162, %s163
    %p175 = scmp.eq.s32.totalorder %s24, 1
    %p176 = por %p174, %p175
    %p178 = scmp.ne.s32.totalorder %s163, %s177
    %p179 = scmp.eq.s32.totalorder %s24, 0
    %p180 = por %p178, %p179
    %s182 = sadd.s32 %s181, 1
    %p185 = scmp.eq.s32.totalorder %s18, 1
    %p186 = scmp.ne.s32.totalorder %s181, %s183
    %p187 = scmp.eq.s32.totalorder %s18, 0
    %p188 = por %p186, %p187
    %p189 = scmp.ne.s32.totalorder %s181, %s183
    %p190 = scmp.eq.s32.totalorder %s23, 1
    %p191 = por %p189, %p190
    %p192 = scmp.ne.s32.totalorder %s183, %s184
    %p193 = scmp.eq.s32.totalorder %s23, 0
    %p194 = por %p192, %p193
    %p195 = scmp.ne.s32.totalorder %s183, %s184
    %p196 = scmp.eq.s32.totalorder %s24, 1
    %p197 = por %p195, %p196
    %p199 = scmp.ne.s32.totalorder %s184, %s198
    %p200 = scmp.eq.s32.totalorder %s24, 0
    %p201 = por %p199, %p200
    %s203 = sadd.s32 %s202, 1
    %p206 = scmp.eq.s32.totalorder %s18, 1
    %p207 = scmp.ne.s32.totalorder %s202, %s204
    %p208 = scmp.eq.s32.totalorder %s18, 0
    %p209 = por %p207, %p208
    %p210 = scmp.ne.s32.totalorder %s202, %s204
    %p211 = scmp.eq.s32.totalorder %s23, 1
    %p212 = por %p210, %p211
    %p213 = scmp.ne.s32.totalorder %s204, %s205
    %p214 = scmp.eq.s32.totalorder %s23, 0
    %p215 = por %p213, %p214
    %p216 = scmp.ne.s32.totalorder %s204, %s205
    %p217 = scmp.eq.s32.totalorder %s24, 1
    %p218 = por %p216, %p217
    %p220 = scmp.ne.s32.totalorder %s205, %s219
    %p221 = scmp.eq.s32.totalorder %s24, 0
    %p222 = por %p220, %p221
    %s224 = sadd.s32 %s223, 1
    %p227 = scmp.eq.s32.totalorder %s18, 1
    %p228 = scmp.ne.s32.totalorder %s223, %s225
    %p229 = scmp.eq.s32.totalorder %s18, 0
    %p230 = por %p228, %p229
    %p231 = scmp.ne.s32.totalorder %s223, %s225
    %p232 = scmp.eq.s32.totalorder %s23, 1
    %p233 = por %p231, %p232
    %p234 = scmp.ne.s32.totalorder %s225, %s226
    %p235 = scmp.eq.s32.totalorder %s23, 0
    %p236 = por %p234, %p235
    %p237 = scmp.ne.s32.totalorder %s225, %s226
    %p238 = scmp.eq.s32.totalorder %s24, 1
    %p239 = por %p237, %p238
    %p241 = scmp.ne.s32.totalorder %s226, %s240
    %p242 = scmp.eq.s32.totalorder %s24, 0
    %p243 = por %p241, %p242
    %s245 = sadd.s32 %s244, 1
    %p248 = scmp.eq.s32.totalorder %s18, 1
    %p249 = scmp.ne.s32.totalorder %s244, %s246
    %p250 = scmp.eq.s32.totalorder %s18, 0
    %p251 = por %p249, %p250
    %p252 = scmp.ne.s32.totalorder %s244, %s246
    %p253 = scmp.eq.s32.totalorder %s23, 1
    %p254 = por %p252, %p253
    %p255 = scmp.ne.s32.totalorder %s246, %s247
    %p256 = scmp.eq.s32.totalorder %s23, 0
    %p257 = por %p255, %p256
    %p258 = scmp.ne.s32.totalorder %s246, %s247
    %p259 = scmp.eq.s32.totalorder %s24, 1
    %p260 = por %p258, %p259
    %p262 = scmp.ne.s32.totalorder %s247, %s261
    %p263 = scmp.eq.s32.totalorder %s24, 0
    %p264 = por %p262, %p263
    %s265 = ssub.s32 %s25, %s37
    %s266 = ssub.s32 %s26, %s33
    %s267 = sor.u32 %s265, %s266
    %p268 = scmp.eq.s32.totalorder %s267, 0
    %s270 = sadd.s32 %s269, 1
    %s271 = scalar_select %p268, %s269, %s270
    %p274 = pneg %p268
    %p275 = scmp.eq.s32.totalorder %s18, 1
    %p276 = por %p274, %p275
    %p277 = scmp.ne.s32.totalorder %s269, %s272
    %p278 = scmp.eq.s32.totalorder %s18, 0
    %p279 = por %p277, %p278
    %p280 = scmp.ne.s32.totalorder %s269, %s272
    %p281 = scmp.eq.s32.totalorder %s23, 1
    %p282 = por %p280, %p281
    %p283 = scmp.ne.s32.totalorder %s272, %s273
    %p284 = scmp.eq.s32.totalorder %s23, 0
    %p285 = por %p283, %p284
    %p286 = scmp.ne.s32.totalorder %s272, %s273
    %p287 = scmp.eq.s32.totalorder %s24, 1
    %p288 = por %p286, %p287
    %p290 = scmp.ne.s32.totalorder %s273, %s289
    %p291 = scmp.eq.s32.totalorder %s24, 0
    %p292 = por %p290, %p291
    %s293 = ssub.s32 %s25, %s37
    %s294 = ssub.s32 %s26, %s33
    %s295 = sor.u32 %s293, %s294
    %p296 = scmp.eq.s32.totalorder %s295, 0
    %s298 = sadd.s32 %s297, 1
    %s299 = scalar_select %p296, %s297, %s298
    %p302 = pneg %p296
    %p303 = scmp.eq.s32.totalorder %s18, 1
    %p304 = por %p302, %p303
    %p305 = scmp.ne.s32.totalorder %s297, %s300
    %p306 = scmp.eq.s32.totalorder %s18, 0
    %p307 = por %p305, %p306
    %p308 = scmp.ne.s32.totalorder %s297, %s300
    %p309 = scmp.eq.s32.totalorder %s23, 1
    %p310 = por %p308, %p309
    %p311 = scmp.ne.s32.totalorder %s300, %s301
    %p312 = scmp.eq.s32.totalorder %s23, 0
    %p313 = por %p311, %p312
    %p314 = scmp.ne.s32.totalorder %s300, %s301
    %p315 = scmp.eq.s32.totalorder %s24, 1
    %p316 = por %p314, %p315
    %p318 = scmp.ne.s32.totalorder %s301, %s317
    %p319 = scmp.eq.s32.totalorder %s24, 0
    %p320 = por %p318, %p319
    %p321 = scmp.le.s32.totalorder 1, %s18
    %p322 = scmp.lt.s32.totalorder %s18, 3
    %p323 = pnand %p321, %p322
    %p324 = pneg %p323
    // Predicated region
    $region9: #{tpu_custom_call.1} parent=5 // pred_check
      _
    $region10: #{tpu_custom_call.1} parent=5 // pred_check_branch
      %326 = sbr.rel (%p323) target = $region12
    $region11: #{tpu_custom_call.1} parent=5 // pred_region
      %s327 = ssub.s32 %s18, 1
      // Predicated region
      $region13: #{tpu_custom_call.1} parent=11 // pred_check
        %p328 = pneg %p131
      $region14: #{tpu_custom_call.1} parent=11 // pred_check_branch
        %330 = sbr.rel (%p328) target = $region16
      $region15: #{tpu_custom_call.1} parent=11 // pred_region
        _
      $region16: #{tpu_custom_call.1} parent=11 // pred_fallthru
        _
      // Predicated region
      $region17: #{tpu_custom_call.1} parent=11 // pred_check
        %p331 = pneg %p152
      $region18: #{tpu_custom_call.1} parent=11 // pred_check_branch
        %333 = sbr.rel (%p331) target = $region20
      $region19: #{tpu_custom_call.1} parent=11 // pred_region
        _
      $region20: #{tpu_custom_call.1} parent=11 // pred_fallthru
        _
      // Predicated region
      $region21: #{tpu_custom_call.1} parent=11 // pred_check
        %p334 = pneg %p173
      $region22: #{tpu_custom_call.1} parent=11 // pred_check_branch
        %336 = sbr.rel (%p334) target = $region24
      $region23: #{tpu_custom_call.1} parent=11 // pred_region
        _
      $region24: #{tpu_custom_call.1} parent=11 // pred_fallthru
        _
      // Predicated region
      $region25: #{tpu_custom_call.1} parent=11 // pred_check
        %p337 = pneg %p194
      $region26: #{tpu_custom_call.1} parent=11 // pred_check_branch
        %339 = sbr.rel (%p337) target = $region28
      $region27: #{tpu_custom_call.1} parent=11 // pred_region
        _
      $region28: #{tpu_custom_call.1} parent=11 // pred_fallthru
        _
      // Predicated region
      $region29: #{tpu_custom_call.1} parent=11 // pred_check
        %p340 = pneg %p215
      $region30: #{tpu_custom_call.1} parent=11 // pred_check_branch
        %342 = sbr.rel (%p340) target = $region32
      $region31: #{tpu_custom_call.1} parent=11 // pred_region
        _
      $region32: #{tpu_custom_call.1} parent=11 // pred_fallthru
        _
      // Predicated region
      $region33: #{tpu_custom_call.1} parent=11 // pred_check
        %p343 = pneg %p236
      $region34: #{tpu_custom_call.1} parent=11 // pred_check_branch
        %345 = sbr.rel (%p343) target = $region36
      $region35: #{tpu_custom_call.1} parent=11 // pred_region
        _
      $region36: #{tpu_custom_call.1} parent=11 // pred_fallthru
        _
      // Predicated region
      $region37: #{tpu_custom_call.1} parent=11 // pred_check
        %p346 = pneg %p257
      $region38: #{tpu_custom_call.1} parent=11 // pred_check_branch
        %348 = sbr.rel (%p346) target = $region40
      $region39: #{tpu_custom_call.1} parent=11 // pred_region
        _
      $region40: #{tpu_custom_call.1} parent=11 // pred_fallthru
        _
    $region12: #{tpu_custom_call.1} parent=5 // pred_fallthru
      _
    %p349 = scmp.lt.s32.totalorder %s18, 2
    // Predicated region
    $region41: #{tpu_custom_call.1} parent=5 // pred_check
      %p350 = pneg %p349
    $region42: #{tpu_custom_call.1} parent=5 // pred_check_branch
      %352 = sbr.rel (%p350) target = $region44
    $region43: #{tpu_custom_call.1} parent=5 // pred_region
      // Predicated region
      $region45: #{tpu_custom_call.1} parent=43 // pred_check
        %p353 = pneg %p52
      $region46: #{tpu_custom_call.1} parent=43 // pred_check_branch
        %355 = sbr.rel (%p353) target = $region48
      $region47: #{tpu_custom_call.1} parent=43 // pred_region
        %p356 = scmp.lt.s32.totalorder %s25, 1
        %s357 = scalar_select %p356, %s25, 1
        %p358 = scmp.lt.s32.totalorder %s26, 0
        %s359 = scalar_select %p358, %s26, 0
        %s360 = smul.addr %s357, 4
        %s361 = sadd.s32 %s359, %s360
        %s362 = smul.addr %s361, 4
        %s363 = scalar_lea.vmem %s0, %s362
      $region48: #{tpu_custom_call.1} parent=43 // pred_fallthru
        _
      // Predicated region
      $region49: #{tpu_custom_call.1} parent=43 // pred_check
        %p364 = pneg %p78
      $region50: #{tpu_custom_call.1} parent=43 // pred_check_branch
        %366 = sbr.rel (%p364) target = $region52
      $region51: #{tpu_custom_call.1} parent=43 // pred_region
        %p367 = scmp.lt.s32.totalorder %s25, 1
        %s368 = scalar_select %p367, %s25, 1
        %s369 = smul.addr %s368, 4
        %s370 = smul.addr %s369, 4
        %s371 = scalar_lea.vmem %s1, %s370
      $region52: #{tpu_custom_call.1} parent=43 // pred_fallthru
        _
      // Predicated region
      $region53: #{tpu_custom_call.1} parent=43 // pred_check
        %p372 = pneg %p104
      $region54: #{tpu_custom_call.1} parent=43 // pred_check_branch
        %374 = sbr.rel (%p372) target = $region56
      $region55: #{tpu_custom_call.1} parent=43 // pred_region
        %p375 = scmp.lt.s32.totalorder %s25, 1
        %s376 = scalar_select %p375, %s25, 1
        %s377 = scalar_lea.vmem %s2, %s376
      $region56: #{tpu_custom_call.1} parent=43 // pred_fallthru
        _
    $region44: #{tpu_custom_call.1} parent=5 // pred_fallthru
      _
    %p378 = scmp.le.s32.totalorder 1, %s18
    %p379 = scmp.lt.s32.totalorder %s18, 3
    %p380 = pnand %p378, %p379
    %p381 = pneg %p380
    // Predicated region
    $region57: #{tpu_custom_call.1} parent=5 // pred_check
      _
    $region58: #{tpu_custom_call.1} parent=5 // pred_check_branch
      %383 = sbr.rel (%p380) target = $region60
    $region59: #{tpu_custom_call.1} parent=5 // pred_region
      %s384 = ssub.s32 %s18, 1
      %p385 = scmp.lt.s32.totalorder %s27, 1
      %s386 = scalar_select %p385, %s27, 1
      %p387 = scmp.lt.s32.totalorder %s28, 0
      %s388 = scalar_select %p387, %s28, 0
      %s389 = smul.addr %s386, 4
      %s390 = sadd.s32 %s388, %s389
      %s391 = smul.addr %s390, 4
      %s392 = scalar_lea.vmem %s0, %s391
      %p393 = pneg %p58
      %p394 = pneg %p55
      %p395 = scmp.lt.s32.totalorder %s27, 1
      %s396 = scalar_select %p395, %s27, 1
      %s397 = smul.addr %s396, 4
      %s398 = smul.addr %s397, 4
      %s399 = scalar_lea.vmem %s1, %s398
      %p400 = pneg %p84
      %p401 = pneg %p81
      %p402 = scmp.lt.s32.totalorder %s27, 1
      %s403 = scalar_select %p402, %s27, 1
      %s404 = scalar_lea.vmem %s2, %s403
      %p405 = pneg %p110
      %p406 = pneg %p107
      %p407 = pneg %p131
      %p408 = pneg %p128
      %p409 = pneg %p152
      %p410 = pneg %p149
      %p411 = pneg %p173
      %p412 = pneg %p170
      %p413 = pneg %p194
      %p414 = pneg %p191
      %p415 = pneg %p215
      %p416 = pneg %p212
      %p417 = pneg %p236
      %p418 = pneg %p233
      %p419 = pneg %p257
      %p420 = pneg %p254
      %p421 = pneg %p285
      %p422 = pneg %p282
      %p423 = scmp.lt.s32.totalorder %s27, 1
      %s424 = scalar_select %p423, %s27, 1
      %p425 = scmp.lt.s32.totalorder %s28, 0
      %s426 = scalar_select %p425, %s28, 0
      %s427 = smul.addr %s424, 8
      %s428 = sadd.s32 %s426, %s427
      %s429 = smul.addr %s428, 4
      %s430 = scalar_lea.vmem %s10, %s429
      %p431 = pneg %p313
      %p432 = pneg %p310
      %p433 = scmp.lt.s32.totalorder %s27, 1
      %s434 = scalar_select %p433, %s27, 1
      %p435 = scmp.lt.s32.totalorder %s28, 0
      %s436 = scalar_select %p435, %s28, 0
      %s437 = smul.addr %s436, 8
      %s438 = smul.addr %s434, 8
      %s439 = sadd.s32 %s437, %s438
      %s440 = smul.addr %s439, 8
      %s441 = scalar_lea.vmem %s11, %s440
      %p442 = scmp.lt.s32.totalorder %s27, 1
      %s443 = scalar_select %p442, %s27, 1
      %p444 = scmp.lt.s32.totalorder %s28, 0
      %s445 = scalar_select %p444, %s28, 0
      %s446 = smul.addr %s443, 4
      %s447 = sadd.s32 %s445, %s446
      %s448 = smul.addr %s447, 4
      %s449 = scalar_lea.vmem %s0, %s448
      %p450 = scmp.lt.s32.totalorder %s27, 1
      %s451 = scalar_select %p450, %s27, 1
      %s452 = smul.addr %s451, 4
      %s453 = smul.addr %s452, 4
      %s454 = scalar_lea.vmem %s1, %s453
      %p455 = scmp.lt.s32.totalorder %s27, 1
      %s456 = scalar_select %p455, %s27, 1
      %s457 = scalar_lea.vmem %s2, %s456
      %p458 = scmp.lt.s32.totalorder %s27, 1
      %s459 = scalar_select %p458, %s27, 1
      %p460 = scmp.lt.s32.totalorder %s28, 0
      %s461 = scalar_select %p460, %s28, 0
      %s462 = smul.addr %s459, 8
      %s463 = sadd.s32 %s461, %s462
      %s464 = smul.addr %s463, 4
      %s465 = scalar_lea.vmem %s10, %s464
      %p466 = scmp.lt.s32.totalorder %s27, 1
      %s467 = scalar_select %p466, %s27, 1
      %p468 = scmp.lt.s32.totalorder %s28, 0
      %s469 = scalar_select %p468, %s28, 0
      %s470 = smul.addr %s469, 8
      %s471 = smul.addr %s467, 8
      %s472 = sadd.s32 %s470, %s471
      %s473 = smul.addr %s472, 8
      %s474 = scalar_lea.vmem %s11, %s473
      %v476 = vld [vmem:[%s449] sm:$0xf]
      %v477 = vld [vmem:[%s449 + $0x4] sm:$0xf]
      %v478 = vld [vmem:[%s449 + $0x8] sm:$0xf]
      %v479 = vld [vmem:[%s449 + $0xc] sm:$0xf]
      %v480 = vld [vmem:[%s4] sm:$0xf]
      %v481 = vld [vmem:[%s4 + $0x4] sm:$0xf]
      %v482 = vld [vmem:[%s4 + $0x8] sm:$0xf]
      %v483 = vld [vmem:[%s4 + $0xc] sm:$0xf]
      %v484 = vld [vmem:[%s4 + $0x10] sm:$0xf]
      %v485 = vld [vmem:[%s4 + $0x14] sm:$0xf]
      %v486 = vld [vmem:[%s4 + $0x18] sm:$0xf]
      %v487 = vld [vmem:[%s4 + $0x1c] sm:$0xf]
      %v488 = vld [vmem:[%s4 + $0x20] sm:$0xf]
      %v489 = vld [vmem:[%s4 + $0x24] sm:$0xf]
      %v490 = vld [vmem:[%s4 + $0x28] sm:$0xf]
      %v491 = vld [vmem:[%s4 + $0x2c] sm:$0xf]
      %v492 = vld [vmem:[%s5] sm:$0xff]
      %v493 = vld [vmem:[%s5 + $0x8] sm:$0xff]
      %v494 = vld [vmem:[%s5 + $0x10] sm:$0xff]
      %v495 = vld [vmem:[%s5 + $0x18] sm:$0xff]
      %v496 = vld [vmem:[%s5 + $0x20] sm:$0xff]
      %v497 = vld [vmem:[%s5 + $0x28] sm:$0xff]
      %v498 = vld [vmem:[%s5 + $0x30] sm:$0xff]
      %v499 = vld [vmem:[%s5 + $0x38] sm:$0xff]
      %v500 = vld [vmem:[%s5 + $0x40] sm:$0xff]
      %v501 = vld [vmem:[%s5 + $0x48] sm:$0xff]
      %v502 = vld [vmem:[%s5 + $0x50] sm:$0xff]
      %v503 = vld [vmem:[%s5 + $0x58] sm:$0xff]
      %505 = vset.pattern.permute.xlu0 0
      %506 = vperm.xlu0 %505, %v492
      %v507 = vpop.permute.xlu0 %506
      %510 = vset.pattern.permute.xlu0 0
      %511 = vperm.xlu0 %510, %v493
      %v512 = vpop.permute.xlu0 %511
      %515 = vset.pattern.permute.xlu0 0
      %516 = vperm.xlu0 %515, %v494
      %v517 = vpop.permute.xlu0 %516
      %520 = vset.pattern.permute.xlu0 0
      %521 = vperm.xlu0 %520, %v495
      %v522 = vpop.permute.xlu0 %521
      %525 = vset.pattern.permute.xlu0 0
      %526 = vperm.xlu0 %525, %v496
      %v527 = vpop.permute.xlu0 %526
      %530 = vset.pattern.permute.xlu0 0
      %531 = vperm.xlu0 %530, %v497
      %v532 = vpop.permute.xlu0 %531
      %535 = vset.pattern.permute.xlu0 0
      %536 = vperm.xlu0 %535, %v498
      %v537 = vpop.permute.xlu0 %536
      %540 = vset.pattern.permute.xlu0 0
      %541 = vperm.xlu0 %540, %v499
      %v542 = vpop.permute.xlu0 %541
      %545 = vset.pattern.permute.xlu0 0
      %546 = vperm.xlu0 %545, %v500
      %v547 = vpop.permute.xlu0 %546
      %550 = vset.pattern.permute.xlu0 0
      %551 = vperm.xlu0 %550, %v501
      %v552 = vpop.permute.xlu0 %551
      %555 = vset.pattern.permute.xlu0 0
      %556 = vperm.xlu0 %555, %v502
      %v557 = vpop.permute.xlu0 %556
      %560 = vset.pattern.permute.xlu0 0
      %561 = vperm.xlu0 %560, %v503
      %v562 = vpop.permute.xlu0 %561
      %v576 = vunpack.c.l.b16 %v480
      %v577 = vunpack.c.l.b16 %v481
      %v578 = vunpack.c.l.b16 %v482
      %v579 = vunpack.c.l.b16 %v483
      %v580 = vunpack.c.l.b16 %v484
      %v581 = vunpack.c.l.b16 %v485
      %v582 = vunpack.c.l.b16 %v486
      %v583 = vunpack.c.l.b16 %v487
      %v584 = vunpack.c.l.b16 %v488
      %v585 = vunpack.c.l.b16 %v489
      %v586 = vunpack.c.l.b16 %v490
      %v587 = vunpack.c.l.b16 %v491
      %v588 = vpack.c.b16 %v577, %v576
      %v589 = vpack.c.b16 %v579, %v578
      %v590 = vpack.c.b16 %v581, %v580
      %v591 = vpack.c.b16 %v583, %v582
      %v592 = vpack.c.b16 %v585, %v584
      %v593 = vpack.c.b16 %v587, %v586
      %v598 = vunpack.c.l.b16 %v476
      %v599 = vunpack.c.l.b16 %v477
      %v600 = vunpack.c.l.b16 %v478
      %v601 = vunpack.c.l.b16 %v479
      %v602 = vpack.c.b16 %v599, %v598
      %v603 = vpack.c.b16 %v601, %v600
      %vm606 = vcmask 261120
      %v608 = vsel %vm606, %v588, 0
      %v611 = vsel %vm606, %v589, 0
      %v614 = vsel %vm606, %v590, 0
      %v617 = vsel %vm606, %v591, 0
      %v620 = vsel %vm606, %v592, 0
      %v623 = vsel %vm606, %v593, 0
      %625 = vmatpush.bf16.msra.mxu0 0
      %626 = vmatpush.bf16.msra.mxu0 0
      %627 = vmatpush.bf16.msra.mxu0 0
      %628 = vmatpush.bf16.msra.mxu0 0
      %629 = vmatpush.bf16.msra.mxu0 0
      %630 = vmatpush.bf16.msra.mxu0 0
      %631 = vmatpush.bf16.msra.mxu0 %v603
      %632 = vmatpush.bf16.msra.mxu0 %v602
      %633 = vmatmul.bf16.gmra.mxu0 %v608
      %v634 = vpop.f32.mrf.mxu0
      %v635 = vadd.f32 %v507, %v634
      %v636 = vpop.f32.mrf.mxu0
      %v637 = vadd.f32 %v512, %v636
      %638 = vmatmul.bf16.gmra.mxu0 %v611
      %v639 = vpop.f32.mrf.mxu0
      %v640 = vadd.f32 %v517, %v639
      %v641 = vpop.f32.mrf.mxu0
      %v642 = vadd.f32 %v522, %v641
      %643 = vmatmul.bf16.gmra.mxu0 %v614
      %v644 = vpop.f32.mrf.mxu0
      %v645 = vadd.f32 %v527, %v644
      %v646 = vpop.f32.mrf.mxu0
      %v647 = vadd.f32 %v532, %v646
      %648 = vmatmul.bf16.gmra.mxu0 %v617
      %v649 = vpop.f32.mrf.mxu0
      %v650 = vadd.f32 %v537, %v649
      %v651 = vpop.f32.mrf.mxu0
      %v652 = vadd.f32 %v542, %v651
      %653 = vmatmul.bf16.gmra.mxu0 %v620
      %v654 = vpop.f32.mrf.mxu0
      %v655 = vadd.f32 %v547, %v654
      %v656 = vpop.f32.mrf.mxu0
      %v657 = vadd.f32 %v552, %v656
      %658 = vmatmul.bf16.gmra.mxu0 %v623
      %v659 = vpop.f32.mrf.mxu0
      %v660 = vadd.f32 %v557, %v659
      %v661 = vpop.f32.mrf.mxu0
      %v662 = vadd.f32 %v562, %v661
      %663 = vdwg.mxu0
      %v664 = vld [vmem:[%s3] sm:$0xff]
      %v665 = vld [vmem:[%s3 + $0x8] sm:$0xff]
      %v666 = vld [vmem:[%s3 + $0x10] sm:$0xff]
      %v667 = vld [vmem:[%s3 + $0x18] sm:$0xff]
      %669 = vset.pattern.permute.xlu0 0
      %670 = vperm.xlu0 %669, %v664
      %v671 = vpop.permute.xlu0 %670
      %674 = vset.pattern.permute.xlu0 0
      %675 = vperm.xlu0 %674, %v665
      %v676 = vpop.permute.xlu0 %675
      %679 = vset.pattern.permute.xlu0 0
      %680 = vperm.xlu0 %679, %v666
      %v681 = vpop.permute.xlu0 %680
      %684 = vset.pattern.permute.xlu0 0
      %685 = vperm.xlu0 %684, %v667
      %v686 = vpop.permute.xlu0 %685
      %v688 = vmul.f32 %v635, %v671
      %v689 = vmul.f32 %v637, %v676
      %v690 = vmul.f32 %v640, %v681
      %v691 = vmul.f32 %v642, %v686
      %692 = vset.pattern.permute.xlu0 1
      %693 = vperm.xlu0 %692, %v664
      %v694 = vpop.permute.xlu0 %693
      %696 = vset.pattern.permute.xlu0 1
      %697 = vperm.xlu0 %696, %v665
      %v698 = vpop.permute.xlu0 %697
      %700 = vset.pattern.permute.xlu0 1
      %701 = vperm.xlu0 %700, %v666
      %v702 = vpop.permute.xlu0 %701
      %704 = vset.pattern.permute.xlu0 1
      %705 = vperm.xlu0 %704, %v667
      %v706 = vpop.permute.xlu0 %705
      %v708 = vmul.f32 %v635, %v694
      %v709 = vmul.f32 %v637, %v698
      %v710 = vmul.f32 %v640, %v702
      %v711 = vmul.f32 %v642, %v706
      %712 = vset.pattern.permute.xlu0 2
      %713 = vperm.xlu0 %712, %v664
      %v714 = vpop.permute.xlu0 %713
      %716 = vset.pattern.permute.xlu0 2
      %717 = vperm.xlu0 %716, %v665
      %v718 = vpop.permute.xlu0 %717
      %720 = vset.pattern.permute.xlu0 2
      %721 = vperm.xlu0 %720, %v666
      %v722 = vpop.permute.xlu0 %721
      %724 = vset.pattern.permute.xlu0 2
      %725 = vperm.xlu0 %724, %v667
      %v726 = vpop.permute.xlu0 %725
      %v728 = vmul.f32 %v635, %v714
      %v729 = vmul.f32 %v637, %v718
      %v730 = vmul.f32 %v640, %v722
      %v731 = vmul.f32 %v642, %v726
      %732 = vset.pattern.permute.xlu0 3
      %733 = vperm.xlu0 %732, %v664
      %v734 = vpop.permute.xlu0 %733
      %736 = vset.pattern.permute.xlu0 3
      %737 = vperm.xlu0 %736, %v665
      %v738 = vpop.permute.xlu0 %737
      %740 = vset.pattern.permute.xlu0 3
      %741 = vperm.xlu0 %740, %v666
      %v742 = vpop.permute.xlu0 %741
      %744 = vset.pattern.permute.xlu0 3
      %745 = vperm.xlu0 %744, %v667
      %v746 = vpop.permute.xlu0 %745
      %v748 = vmul.f32 %v635, %v734
      %v749 = vmul.f32 %v637, %v738
      %v750 = vmul.f32 %v640, %v742
      %v751 = vmul.f32 %v642, %v746
      %756 = vrot.lane.b32.xlu0 %v708, 16
      %v757 = vpop.permute.xlu0 %756
      %758 = vrot.lane.b32.xlu0 %v709, 16
      %v759 = vpop.permute.xlu0 %758
      %760 = vrot.lane.b32.xlu0 %v710, 16
      %v761 = vpop.permute.xlu0 %760
      %762 = vrot.lane.b32.xlu0 %v711, 16
      %v763 = vpop.permute.xlu0 %762
      %772 = vrot.lane.b32.xlu0 %v728, 32
      %v773 = vpop.permute.xlu0 %772
      %774 = vrot.lane.b32.xlu0 %v729, 32
      %v775 = vpop.permute.xlu0 %774
      %776 = vrot.lane.b32.xlu0 %v730, 32
      %v777 = vpop.permute.xlu0 %776
      %778 = vrot.lane.b32.xlu0 %v731, 32
      %v779 = vpop.permute.xlu0 %778
      %788 = vrot.lane.b32.xlu0 %v748, 48
      %v789 = vpop.permute.xlu0 %788
      %790 = vrot.lane.b32.xlu0 %v749, 48
      %v791 = vpop.permute.xlu0 %790
      %792 = vrot.lane.b32.xlu0 %v750, 48
      %v793 = vpop.permute.xlu0 %792
      %794 = vrot.lane.b32.xlu0 %v751, 48
      %v795 = vpop.permute.xlu0 %794
      %vm800 = vcmask 130048
      %v801 = vsel %vm800, %v688, %v757
      %v802 = vsel %vm800, %v689, %v759
      %v803 = vsel %vm800, %v690, %v761
      %v804 = vsel %vm800, %v691, %v763
      %v805 = vsel %vm606, %v801, %v773
      %v806 = vsel %vm606, %v802, %v775
      %v807 = vsel %vm606, %v803, %v777
      %v808 = vsel %vm606, %v804, %v779
      %vm809 = vcmask 392192
      %v810 = vsel %vm809, %v805, %v789
      %v811 = vsel %vm809, %v806, %v791
      %v812 = vsel %vm809, %v807, %v793
      %v813 = vsel %vm809, %v808, %v795
      %v814 = vpack.c.bf16 %v811, %v810
      %v815 = vpack.c.bf16 %v813, %v812
      %v816 = vld [vmem:[%s454] sm:$0xf]
      %v817 = vld [vmem:[%s454 + $0x4] sm:$0xf]
      %v818 = vld [vmem:[%s454 + $0x8] sm:$0xf]
      %v819 = vld [vmem:[%s454 + $0xc] sm:$0xf]
      %v820 = vld [vmem:[%s457] sm:$0x1]
      %v821 = vld [vmem:[%s6] sm:$0xf]
      %v822 = vld [vmem:[%s6 + $0x4] sm:$0xf]
      %v823 = vld [vmem:[%s6 + $0x8] sm:$0xf]
      %v824 = vld [vmem:[%s6 + $0xc] sm:$0xf]
      %v825 = vld [vmem:[%s6 + $0x10] sm:$0xf]
      %v826 = vld [vmem:[%s6 + $0x14] sm:$0xf]
      %v827 = vld [vmem:[%s6 + $0x18] sm:$0xf]
      %v828 = vld [vmem:[%s6 + $0x1c] sm:$0xf]
      %v829 = vld [vmem:[%s7] sm:$0xff]
      %v830 = vld [vmem:[%s7 + $0x8] sm:$0xff]
      %v831 = vld [vmem:[%s7 + $0x10] sm:$0xff]
      %v832 = vld [vmem:[%s7 + $0x18] sm:$0xff]
      %v833 = vld [vmem:[%s7 + $0x20] sm:$0xff]
      %v834 = vld [vmem:[%s7 + $0x28] sm:$0xff]
      %v835 = vld [vmem:[%s7 + $0x30] sm:$0xff]
      %v836 = vld [vmem:[%s7 + $0x38] sm:$0xff]
      %838 = vset.pattern.permute.xlu0 0
      %839 = vperm.xlu0 %838, %v829
      %v840 = vpop.permute.xlu0 %839
      %843 = vset.pattern.permute.xlu0 0
      %844 = vperm.xlu0 %843, %v830
      %v845 = vpop.permute.xlu0 %844
      %848 = vset.pattern.permute.xlu0 0
      %849 = vperm.xlu0 %848, %v831
      %v850 = vpop.permute.xlu0 %849
      %853 = vset.pattern.permute.xlu0 0
      %854 = vperm.xlu0 %853, %v832
      %v855 = vpop.permute.xlu0 %854
      %858 = vset.pattern.permute.xlu0 0
      %859 = vperm.xlu0 %858, %v833
      %v860 = vpop.permute.xlu0 %859
      %863 = vset.pattern.permute.xlu0 0
      %864 = vperm.xlu0 %863, %v834
      %v865 = vpop.permute.xlu0 %864
      %868 = vset.pattern.permute.xlu0 0
      %869 = vperm.xlu0 %868, %v835
      %v870 = vpop.permute.xlu0 %869
      %873 = vset.pattern.permute.xlu0 0
      %874 = vperm.xlu0 %873, %v836
      %v875 = vpop.permute.xlu0 %874
      %v885 = vunpack.c.l.b16 %v821
      %v886 = vunpack.c.l.b16 %v822
      %v887 = vunpack.c.l.b16 %v823
      %v888 = vunpack.c.l.b16 %v824
      %v889 = vunpack.c.l.b16 %v825
      %v890 = vunpack.c.l.b16 %v826
      %v891 = vunpack.c.l.b16 %v827
      %v892 = vunpack.c.l.b16 %v828
      %v893 = vpack.c.b16 %v886, %v885
      %v894 = vpack.c.b16 %v888, %v887
      %v895 = vpack.c.b16 %v890, %v889
      %v896 = vpack.c.b16 %v892, %v891
      %v901 = vunpack.c.l.b16 %v816
      %v902 = vunpack.c.l.b16 %v817
      %v903 = vunpack.c.l.b16 %v818
      %v904 = vunpack.c.l.b16 %v819
      %v905 = vpack.c.b16 %v902, %v901
      %v906 = vpack.c.b16 %v904, %v903
      %v910 = vsel %vm606, %v893, 0
      %v913 = vsel %vm606, %v894, 0
      %v916 = vsel %vm606, %v895, 0
      %v919 = vsel %vm606, %v896, 0
      %921 = vmatpush.bf16.msra.mxu0 0
      %922 = vmatpush.bf16.msra.mxu0 0
      %923 = vmatpush.bf16.msra.mxu0 0
      %924 = vmatpush.bf16.msra.mxu0 0
      %925 = vmatpush.bf16.msra.mxu0 0
      %926 = vmatpush.bf16.msra.mxu0 0
      %927 = vmatpush.bf16.msra.mxu0 %v906
      %928 = vmatpush.bf16.msra.mxu0 %v905
      %929 = vmatmul.bf16.gmra.mxu0 %v910
      %v930 = vpop.f32.mrf.mxu0
      %v931 = vadd.f32 %v840, %v930
      %v932 = vpop.f32.mrf.mxu0
      %v933 = vadd.f32 %v845, %v932
      %934 = vmatmul.bf16.gmra.mxu0 %v913
      %v935 = vpop.f32.mrf.mxu0
      %v936 = vadd.f32 %v850, %v935
      %v937 = vpop.f32.mrf.mxu0
      %v938 = vadd.f32 %v855, %v937
      %939 = vmatmul.bf16.gmra.mxu0 %v916
      %v940 = vpop.f32.mrf.mxu0
      %v941 = vadd.f32 %v860, %v940
      %v942 = vpop.f32.mrf.mxu0
      %v943 = vadd.f32 %v865, %v942
      %944 = vmatmul.bf16.gmra.mxu0 %v919
      %v945 = vpop.f32.mrf.mxu0
      %v946 = vadd.f32 %v870, %v945
      %v947 = vpop.f32.mrf.mxu0
      %v948 = vadd.f32 %v875, %v947
      %949 = vdwg.mxu0
      %v950 = vpack.c.bf16 %v933, %v931
      %v951 = vpack.c.bf16 %v938, %v936
      %v953 = vperm.slane %v820, 0
      %v955 = vmul.f32 %v941, %v953
      %v956 = vmul.f32 %v943, %v953
      %v957 = vmul.f32 %v946, %v953
      %v958 = vmul.f32 %v948, %v953
      %959 = vxpose.xlu0.c.b16.start [1/8] %v950, 128
      %960 = vxpose.xlu0.c.b16.cont [2/8] %v951, 128
      %961 = vxpose.xlu0.c.b16.cont [3/8] 0, 128
      %962 = vxpose.xlu0.c.b16.cont [4/8] 0, 128
      %963 = vxpose.xlu0.c.b16.cont [5/8] 0, 128
      %964 = vxpose.xlu0.c.b16.cont [6/8] 0, 128
      %965 = vxpose.xlu0.c.b16.cont [7/8] 0, 128
      %966 = vxpose.xlu0.c.b16.end [8/8] 0, 128
      %v967 = vpop.trf.xlu0
      %v968 = vpop.trf.xlu0
      %v969 = vpop.trf.xlu0
      %v970 = vpop.trf.xlu0
      %v971 = vpop.trf.xlu0
      %v972 = vpop.trf.xlu0
      %v973 = vpop.trf.xlu0
      %v974 = vpop.trf.xlu0
      %v976 = vsel %vm606, %v967, 0
      %978 = vmatpush.bf16.msra.mxu0 0
      %979 = vmatpush.bf16.msra.mxu0 0
      %980 = vmatpush.bf16.msra.mxu0 0
      %981 = vmatpush.bf16.msra.mxu0 0
      %982 = vmatpush.bf16.msra.mxu0 0
      %983 = vmatpush.bf16.msra.mxu0 0
      %984 = vmatpush.bf16.msra.mxu0 %v815
      %985 = vmatpush.bf16.msra.mxu0 %v814
      %986 = vmatmul.bf16.gmra.mxu0 %v976
      %v987 = vpop.f32.mrf.mxu0
      %v988 = vadd.f32 0.0, %v987
      %v989 = vpop.f32.mrf.mxu0
      %v990 = vadd.f32 0.0, %v989
      %991 = vdwg.mxu0
      %vm992 = vcmask 523264
      %v993 = vsel %vm992, %v988, -inf
      %vm994 = vcmask 519168
      %v995 = vsel %vm994, %v990, -inf
      %v996 = vmax.f32 %v993, %v995
      %v997 = vrot.slane %v996, 4
      %v998 = vmax.f32 %v996, %v997
      %v999 = vrot.slane %v998, 2
      %v1000 = vmax.f32 %v998, %v999
      %v1001 = vrot.slane %v1000, 1
      %v1002 = vmax.f32 %v1000, %v1001
      %v1003 = vmax.f32 %v1002, -1e+30
      %v1004 = vsub.f32 -1e+30, %v1003
      %v1005 = vmul.f32 %v1004, 1.442695
      %v1006 = vpow.pop %v1005
      %v1007 = vsub.f32 %v988, %v1003
      %v1008 = vsub.f32 %v990, %v1003
      %v1009 = vmul.f32 %v1007, 1.442695
      %v1010 = vpow.pop %v1009
      %v1011 = vmul.f32 %v1008, 1.442695
      %v1012 = vpow.pop %v1011
      %v1013 = vmul.f32 %v1006, 0.0
      %v1014 = vsel %vm992, %v1010, 0.0
      %v1015 = vsel %vm994, %v1012, 0.0
      %v1016 = vadd.f32 %v1014, %v1015
      %v1017 = vrot.slane %v1016, 4
      %v1018 = vadd.f32 %v1016, %v1017
      %v1019 = vrot.slane %v1018, 2
      %v1020 = vadd.f32 %v1018, %v1019
      %v1021 = vrot.slane %v1020, 1
      %v1022 = vadd.f32 %v1020, %v1021
      %v1023 = vadd.f32 %v1013, %v1022
      %v1024 = vpack.c.bf16 %v1010, %v1010
      %v1025 = vpack.c.bf16 %v1012, %v1012
      %v1026 = vpack.c.bf16 %v955, %v955
      %v1029 = vunpack.c.l.b16 %v1024
      %v1030 = vunpack.c.l.b16 %v1025
      %v1031 = vpack.c.b16 %v1030, %v1029
      %vm1032 = vcmask 97280
      %v1034 = vsel %vm1032, %v1026, 0
      %vm1036 = vcmask 1045504
      %v1038 = vsel %vm1036, %v1031, 0
      %1040 = vmatpush.bf16.msra.mxu0 0
      %1041 = vmatpush.bf16.msra.mxu0 0
      %1042 = vmatpush.bf16.msra.mxu0 0
      %1043 = vmatpush.bf16.msra.mxu0 0
      %1044 = vmatpush.bf16.msra.mxu0 0
      %1045 = vmatpush.bf16.msra.mxu0 0
      %1046 = vmatpush.bf16.msra.mxu0 0
      %1047 = vmatpush.bf16.msra.mxu0 %v1038
      %1048 = vmatmul.bf16.gmra.mxu0 %v1034
      %v1049 = vpop.f32.mrf.mxu0
      %v1050 = vadd.f32 0.0, %v1049
      %v1051 = vpop.f32.mrf.mxu0
      %1052 = vdwg.mxu0
      %v1053 = vpack.c.bf16 %v956, %v956
      %1054 = vrot.lane.b32.xlu0 %v1031, 112
      %v1055 = vpop.permute.xlu0 %1054
      %v1057 = vsel %vm1032, %v1053, 0
      %v1060 = vsel %vm1036, %v1055, 0
      %1062 = vmatpush.bf16.msra.mxu0 0
      %1063 = vmatpush.bf16.msra.mxu0 0
      %1064 = vmatpush.bf16.msra.mxu0 0
      %1065 = vmatpush.bf16.msra.mxu0 0
      %1066 = vmatpush.bf16.msra.mxu0 0
      %1067 = vmatpush.bf16.msra.mxu0 0
      %1068 = vmatpush.bf16.msra.mxu0 0
      %1069 = vmatpush.bf16.msra.mxu0 %v1060
      %1070 = vmatmul.bf16.gmra.mxu0 %v1057
      %v1071 = vpop.f32.mrf.mxu0
      %v1072 = vadd.f32 0.0, %v1071
      %v1073 = vpop.f32.mrf.mxu0
      %1074 = vdwg.mxu0
      %v1075 = vpack.c.bf16 %v957, %v957
      %1076 = vrot.lane.b32.xlu0 %v1031, 96
      %v1077 = vpop.permute.xlu0 %1076
      %v1079 = vsel %vm1032, %v1075, 0
      %v1082 = vsel %vm1036, %v1077, 0
      %1084 = vmatpush.bf16.msra.mxu0 0
      %1085 = vmatpush.bf16.msra.mxu0 0
      %1086 = vmatpush.bf16.msra.mxu0 0
      %1087 = vmatpush.bf16.msra.mxu0 0
      %1088 = vmatpush.bf16.msra.mxu0 0
      %1089 = vmatpush.bf16.msra.mxu0 0
      %1090 = vmatpush.bf16.msra.mxu0 0
      %1091 = vmatpush.bf16.msra.mxu0 %v1082
      %1092 = vmatmul.bf16.gmra.mxu0 %v1079
      %v1093 = vpop.f32.mrf.mxu0
      %v1094 = vadd.f32 0.0, %v1093
      %v1095 = vpop.f32.mrf.mxu0
      %1096 = vdwg.mxu0
      %v1097 = vpack.c.bf16 %v958, %v958
      %1098 = vrot.lane.b32.xlu0 %v1031, 80
      %v1099 = vpop.permute.xlu0 %1098
      %v1101 = vsel %vm1032, %v1097, 0
      %v1104 = vsel %vm1036, %v1099, 0
      %1106 = vmatpush.bf16.msra.mxu0 0
      %1107 = vmatpush.bf16.msra.mxu0 0
      %1108 = vmatpush.bf16.msra.mxu0 0
      %1109 = vmatpush.bf16.msra.mxu0 0
      %1110 = vmatpush.bf16.msra.mxu0 0
      %1111 = vmatpush.bf16.msra.mxu0 0
      %1112 = vmatpush.bf16.msra.mxu0 0
      %1113 = vmatpush.bf16.msra.mxu0 %v1104
      %1114 = vmatmul.bf16.gmra.mxu0 %v1101
      %v1115 = vpop.f32.mrf.mxu0
      %v1116 = vadd.f32 0.0, %v1115
      %v1117 = vpop.f32.mrf.mxu0
      %1118 = vdwg.mxu0
      %1120 = vrot.lane.b32.xlu0 %v1072, 16
      %v1121 = vpop.permute.xlu0 %1120
      %1124 = vrot.lane.b32.xlu0 %v1094, 32
      %v1125 = vpop.permute.xlu0 %1124
      %1128 = vrot.lane.b32.xlu0 %v1116, 48
      %v1129 = vpop.permute.xlu0 %1128
      %v1131 = vsel %vm800, %v1050, %v1121
      %v1132 = vsel %vm606, %v1131, %v1125
      %v1133 = vsel %vm809, %v1132, %v1129
      %v1134 = vadd.f32 %v1013, %v1133
      %v1135 = vrcp.pop %v1023
      %v1136 = vmul.f32 %v1134, %v1135
      %1138 = vrot.lane.b32.xlu0 %v1136, 112
      %v1139 = vpop.permute.xlu0 %1138
      %1141 = vrot.lane.b32.xlu0 %v1136, 96
      %v1142 = vpop.permute.xlu0 %1141
      %1144 = vrot.lane.b32.xlu0 %v1136, 80
      %v1145 = vpop.permute.xlu0 %1144
      %v1147 = vpack.c.bf16 %v1139, %v1136
      %v1148 = vpack.c.bf16 %v1145, %v1142
      %v1149 = vld [vmem:[%s8] sm:$0xf]
      %v1150 = vld [vmem:[%s8 + $0x4] sm:$0xf]
      %v1151 = vld [vmem:[%s8 + $0x8] sm:$0xf]
      %v1152 = vld [vmem:[%s8 + $0xc] sm:$0xf]
      %v1153 = vld [vmem:[%s8 + $0x10] sm:$0xf]
      %v1154 = vld [vmem:[%s8 + $0x14] sm:$0xf]
      %v1155 = vld [vmem:[%s8 + $0x18] sm:$0xf]
      %v1156 = vld [vmem:[%s8 + $0x1c] sm:$0xf]
      %v1165 = vunpack.c.l.b16 %v1149
      %v1166 = vunpack.c.l.b16 %v1150
      %v1167 = vunpack.c.l.b16 %v1151
      %v1168 = vunpack.c.l.b16 %v1152
      %v1169 = vunpack.c.l.b16 %v1153
      %v1170 = vunpack.c.l.b16 %v1154
      %v1171 = vunpack.c.l.b16 %v1155
      %v1172 = vunpack.c.l.b16 %v1156
      %v1173 = vpack.c.b16 %v1166, %v1165
      %v1174 = vpack.c.b16 %v1168, %v1167
      %v1175 = vpack.c.b16 %v1170, %v1169
      %v1176 = vpack.c.b16 %v1172, %v1171
      %v1178 = vsel %vm606, %v1173, 0
      %v1181 = vsel %vm606, %v1174, 0
      %v1184 = vsel %vm606, %v1175, 0
      %v1187 = vsel %vm606, %v1176, 0
      %1189 = vmatpush.bf16.msra.mxu0 0
      %1190 = vmatpush.bf16.msra.mxu0 0
      %1191 = vmatpush.bf16.msra.mxu0 0
      %1192 = vmatpush.bf16.msra.mxu0 0
      %1193 = vmatpush.bf16.msra.mxu0 0
      %1194 = vmatpush.bf16.msra.mxu0 0
      %1195 = vmatpush.bf16.msra.mxu0 %v1148
      %1196 = vmatpush.bf16.msra.mxu0 %v1147
      %1197 = vmatmul.bf16.gmra.mxu0 %v1178
      %v1198 = vpop.f32.mrf.mxu0
      %v1199 = vadd.f32 0.0, %v1198
      %v1200 = vpop.f32.mrf.mxu0
      %v1201 = vadd.f32 0.0, %v1200
      %1202 = vmatmul.bf16.gmra.mxu0 %v1181
      %v1203 = vpop.f32.mrf.mxu0
      %v1204 = vadd.f32 0.0, %v1203
      %v1205 = vpop.f32.mrf.mxu0
      %v1206 = vadd.f32 0.0, %v1205
      %1207 = vmatmul.bf16.gmra.mxu0 %v1184
      %v1208 = vpop.f32.mrf.mxu0
      %v1209 = vadd.f32 0.0, %v1208
      %v1210 = vpop.f32.mrf.mxu0
      %v1211 = vadd.f32 0.0, %v1210
      %1212 = vmatmul.bf16.gmra.mxu0 %v1187
      %v1213 = vpop.f32.mrf.mxu0
      %v1214 = vadd.f32 0.0, %v1213
      %v1215 = vpop.f32.mrf.mxu0
      %v1216 = vadd.f32 0.0, %v1215
      %1217 = vdwg.mxu0
      %v1218 = vadd.f32 %v645, %v1199
      %v1219 = vadd.f32 %v647, %v1201
      %v1220 = vadd.f32 %v650, %v1204
      %v1221 = vadd.f32 %v652, %v1206
      %v1222 = vadd.f32 %v655, %v1209
      %v1223 = vadd.f32 %v657, %v1211
      %v1224 = vadd.f32 %v660, %v1214
      %v1225 = vadd.f32 %v662, %v1216
      %v1226 = vld [vmem:[%s9] sm:$0xff]
      %v1227 = vld [vmem:[%s9 + $0x8] sm:$0xff]
      %v1228 = vld [vmem:[%s9 + $0x10] sm:$0xff]
      %v1229 = vld [vmem:[%s9 + $0x18] sm:$0xff]
      %v1230 = vld [vmem:[%s9 + $0x20] sm:$0xff]
      %v1231 = vld [vmem:[%s9 + $0x28] sm:$0xff]
      %v1232 = vld [vmem:[%s9 + $0x30] sm:$0xff]
      %v1233 = vld [vmem:[%s9 + $0x38] sm:$0xff]
      %1235 = vset.pattern.permute.xlu0 0
      %1236 = vperm.xlu0 %1235, %v1226
      %v1237 = vpop.permute.xlu0 %1236
      %1240 = vset.pattern.permute.xlu0 0
      %1241 = vperm.xlu0 %1240, %v1227
      %v1242 = vpop.permute.xlu0 %1241
      %1245 = vset.pattern.permute.xlu0 0
      %1246 = vperm.xlu0 %1245, %v1228
      %v1247 = vpop.permute.xlu0 %1246
      %1250 = vset.pattern.permute.xlu0 0
      %1251 = vperm.xlu0 %1250, %v1229
      %v1252 = vpop.permute.xlu0 %1251
      %1255 = vset.pattern.permute.xlu0 0
      %1256 = vperm.xlu0 %1255, %v1230
      %v1257 = vpop.permute.xlu0 %1256
      %1260 = vset.pattern.permute.xlu0 0
      %1261 = vperm.xlu0 %1260, %v1231
      %v1262 = vpop.permute.xlu0 %1261
      %1265 = vset.pattern.permute.xlu0 0
      %1266 = vperm.xlu0 %1265, %v1232
      %v1267 = vpop.permute.xlu0 %1266
      %1270 = vset.pattern.permute.xlu0 0
      %1271 = vperm.xlu0 %1270, %v1233
      %v1272 = vpop.permute.xlu0 %1271
      %v1274 = vadd.f32 %v1218, %v1237
      %v1275 = vadd.f32 %v1219, %v1242
      %v1276 = vadd.f32 %v1220, %v1247
      %v1277 = vadd.f32 %v1221, %v1252
      %v1278 = vadd.f32 %v1222, %v1257
      %v1279 = vadd.f32 %v1223, %v1262
      %v1280 = vadd.f32 %v1224, %v1267
      %v1281 = vadd.f32 %v1225, %v1272
      %v1282 = vpack.c.bf16 %v1274, %v1274
      %v1283 = vpack.c.bf16 %v1275, %v1275
      %v1284 = vpack.c.bf16 %v1276, %v1276
      %v1285 = vpack.c.bf16 %v1277, %v1277
      %v1286 = vpack.c.bf16 %v1278, %v1278
      %v1287 = vpack.c.bf16 %v1279, %v1279
      %v1288 = vpack.c.bf16 %v1280, %v1280
      %v1289 = vpack.c.bf16 %v1281, %v1281
      %vm1290 = vcmask 125952
      %1291 = vst.msk [vmem:[%s465] sm:$0xf] %vm1290, %v1282
      %1292 = vst.msk [vmem:[%s465 + $0x4] sm:$0xf] %vm1290, %v1283
      %1293 = vst.msk [vmem:[%s465 + $0x8] sm:$0xf] %vm1290, %v1284
      %1294 = vst.msk [vmem:[%s465 + $0xc] sm:$0xf] %vm1290, %v1285
      %1295 = vst.msk [vmem:[%s465 + $0x10] sm:$0xf] %vm1290, %v1286
      %1296 = vst.msk [vmem:[%s465 + $0x14] sm:$0xf] %vm1290, %v1287
      %1297 = vst.msk [vmem:[%s465 + $0x18] sm:$0xf] %vm1290, %v1288
      %1298 = vst.msk [vmem:[%s465 + $0x1c] sm:$0xf] %vm1290, %v1289
      %v1299 = vsel %vm800, %v1274, 0.0
      %1300 = vadd.xlane.f32.xlu0 %v1299
      %v1301 = vpop.xlane.xlu0 %1300
      %v1302 = vsel %vm800, %v1275, 0.0
      %1303 = vadd.xlane.f32.xlu0 %v1302
      %v1304 = vpop.xlane.xlu0 %1303
      %v1305 = vsel %vm800, %v1276, 0.0
      %1306 = vadd.xlane.f32.xlu0 %v1305
      %v1307 = vpop.xlane.xlu0 %1306
      %v1308 = vsel %vm800, %v1277, 0.0
      %1309 = vadd.xlane.f32.xlu0 %v1308
      %v1310 = vpop.xlane.xlu0 %1309
      %v1311 = vsel %vm800, %v1278, 0.0
      %1312 = vadd.xlane.f32.xlu0 %v1311
      %v1313 = vpop.xlane.xlu0 %1312
      %v1314 = vsel %vm800, %v1279, 0.0
      %1315 = vadd.xlane.f32.xlu0 %v1314
      %v1316 = vpop.xlane.xlu0 %1315
      %v1317 = vsel %vm800, %v1280, 0.0
      %1318 = vadd.xlane.f32.xlu0 %v1317
      %v1319 = vpop.xlane.xlu0 %1318
      %v1320 = vsel %vm800, %v1281, 0.0
      %1321 = vadd.xlane.f32.xlu0 %v1320
      %v1322 = vpop.xlane.xlu0 %1321
      %v1323 = vmul.f32 %v1274, %v1274
      %v1324 = vmul.f32 %v1275, %v1275
      %v1325 = vmul.f32 %v1276, %v1276
      %v1326 = vmul.f32 %v1277, %v1277
      %v1327 = vmul.f32 %v1278, %v1278
      %v1328 = vmul.f32 %v1279, %v1279
      %v1329 = vmul.f32 %v1280, %v1280
      %v1330 = vmul.f32 %v1281, %v1281
      %v1331 = vsel %vm800, %v1323, 0.0
      %1332 = vadd.xlane.f32.xlu0 %v1331
      %v1333 = vpop.xlane.xlu0 %1332
      %v1334 = vsel %vm800, %v1324, 0.0
      %1335 = vadd.xlane.f32.xlu0 %v1334
      %v1336 = vpop.xlane.xlu0 %1335
      %v1337 = vsel %vm800, %v1325, 0.0
      %1338 = vadd.xlane.f32.xlu0 %v1337
      %v1339 = vpop.xlane.xlu0 %1338
      %v1340 = vsel %vm800, %v1326, 0.0
      %1341 = vadd.xlane.f32.xlu0 %v1340
      %v1342 = vpop.xlane.xlu0 %1341
      %v1343 = vsel %vm800, %v1327, 0.0
      %1344 = vadd.xlane.f32.xlu0 %v1343
      %v1345 = vpop.xlane.xlu0 %1344
      %v1346 = vsel %vm800, %v1328, 0.0
      %1347 = vadd.xlane.f32.xlu0 %v1346
      %v1348 = vpop.xlane.xlu0 %1347
      %v1349 = vsel %vm800, %v1329, 0.0
      %1350 = vadd.xlane.f32.xlu0 %v1349
      %v1351 = vpop.xlane.xlu0 %1350
      %v1352 = vsel %vm800, %v1330, 0.0
      %1353 = vadd.xlane.f32.xlu0 %v1352
      %v1354 = vpop.xlane.xlu0 %1353
      %vm1355 = vcmask 7168
      %v1356 = vsel %vm1355, %v1301, %v1333
      %v1357 = vsel %vm1355, %v1304, %v1336
      %v1358 = vsel %vm1355, %v1307, %v1339
      %v1359 = vsel %vm1355, %v1310, %v1342
      %v1360 = vsel %vm1355, %v1313, %v1345
      %v1361 = vsel %vm1355, %v1316, %v1348
      %v1362 = vsel %vm1355, %v1319, %v1351
      %v1363 = vsel %vm1355, %v1322, %v1354
      %vm1364 = vcmask 15360
      %1365 = vst.msk [vmem:[%s474] sm:$0xff] %vm1364, %v1356
      %1366 = vst.msk [vmem:[%s474 + $0x8] sm:$0xff] %vm1364, %v1357
      %1367 = vst.msk [vmem:[%s474 + $0x10] sm:$0xff] %vm1364, %v1358
      %1368 = vst.msk [vmem:[%s474 + $0x18] sm:$0xff] %vm1364, %v1359
      %1369 = vst.msk [vmem:[%s474 + $0x20] sm:$0xff] %vm1364, %v1360
      %1370 = vst.msk [vmem:[%s474 + $0x28] sm:$0xff] %vm1364, %v1361
      %1371 = vst.msk [vmem:[%s474 + $0x30] sm:$0xff] %vm1364, %v1362
      %1372 = vst.msk [vmem:[%s474 + $0x38] sm:$0xff] %vm1364, %v1363
      %p1373 = scmp.lt.s32.totalorder %s27, 1
      %s1374 = scalar_select %p1373, %s27, 1
      %p1375 = scmp.lt.s32.totalorder %s28, 0
      %s1376 = scalar_select %p1375, %s28, 0
      %s1377 = smul.addr %s1374, 8
      %s1378 = sadd.s32 %s1376, %s1377
      %s1379 = smul.addr %s1378, 4
      %s1380 = scalar_lea.vmem %s10, %s1379
      %p1381 = scmp.lt.s32.totalorder %s27, 1
      %s1382 = scalar_select %p1381, %s27, 1
      %p1383 = scmp.lt.s32.totalorder %s28, 0
      %s1384 = scalar_select %p1383, %s28, 0
      %s1385 = smul.addr %s1384, 8
      %s1386 = smul.addr %s1382, 8
      %s1387 = sadd.s32 %s1385, %s1386
      %s1388 = smul.addr %s1387, 8
      %s1389 = scalar_lea.vmem %s11, %s1388
      // Predicated region
      $region61: #{tpu_custom_call.1} parent=59 // pred_check
        %p1390 = pneg %p282
      $region62: #{tpu_custom_call.1} parent=59 // pred_check_branch
        %1392 = sbr.rel (%p1390) target = $region64
      $region63: #{tpu_custom_call.1} parent=59 // pred_region
        _
      $region64: #{tpu_custom_call.1} parent=59 // pred_fallthru
        _
      // Predicated region
      $region65: #{tpu_custom_call.1} parent=59 // pred_check
        %p1393 = pneg %p310
      $region66: #{tpu_custom_call.1} parent=59 // pred_check_branch
        %1395 = sbr.rel (%p1393) target = $region68
      $region67: #{tpu_custom_call.1} parent=59 // pred_region
        _
      $region68: #{tpu_custom_call.1} parent=59 // pred_fallthru
        _
    $region60: #{tpu_custom_call.1} parent=5 // pred_fallthru
      _
    %p1396 = scmp.le.s32.totalorder 2, %s18
    // Predicated region
    $region69: #{tpu_custom_call.1} parent=5 // pred_check
      %p1397 = pneg %p1396
    $region70: #{tpu_custom_call.1} parent=5 // pred_check_branch
      %1399 = sbr.rel (%p1397) target = $region72
    $region71: #{tpu_custom_call.1} parent=5 // pred_region
      %s1400 = ssub.s32 %s18, 2
      // Predicated region
      $region73: #{tpu_custom_call.1} parent=71 // pred_check
        %p1401 = pneg %p288
      $region74: #{tpu_custom_call.1} parent=71 // pred_check_branch
        %1403 = sbr.rel (%p1401) target = $region76
      $region75: #{tpu_custom_call.1} parent=71 // pred_region
        %p1404 = scmp.lt.s32.totalorder %s29, 1
        %s1405 = scalar_select %p1404, %s29, 1
        %p1406 = scmp.lt.s32.totalorder %s30, 0
        %s1407 = scalar_select %p1406, %s30, 0
        %s1408 = smul.addr %s1405, 8
        %s1409 = sadd.s32 %s1407, %s1408
        %s1410 = smul.addr %s1409, 4
        %s1411 = scalar_lea.vmem %s10, %s1410
      $region76: #{tpu_custom_call.1} parent=71 // pred_fallthru
        _
      // Predicated region
      $region77: #{tpu_custom_call.1} parent=71 // pred_check
        %p1412 = pneg %p316
      $region78: #{tpu_custom_call.1} parent=71 // pred_check_branch
        %1414 = sbr.rel (%p1412) target = $region80
      $region79: #{tpu_custom_call.1} parent=71 // pred_region
        %p1415 = scmp.lt.s32.totalorder %s29, 1
        %s1416 = scalar_select %p1415, %s29, 1
        %p1417 = scmp.lt.s32.totalorder %s30, 0
        %s1418 = scalar_select %p1417, %s30, 0
        %s1419 = smul.addr %s1418, 8
        %s1420 = smul.addr %s1416, 8
        %s1421 = sadd.s32 %s1419, %s1420
        %s1422 = smul.addr %s1421, 8
        %s1423 = scalar_lea.vmem %s11, %s1422
      $region80: #{tpu_custom_call.1} parent=71 // pred_fallthru
        _
    $region72: #{tpu_custom_call.1} parent=5 // pred_fallthru
      _
  $region6: #{tpu_custom_call.1} parent=0 // loop_footer
    %s22 = sadd.s32 1, %s18
  $region7: #{tpu_custom_call.1} parent=0 // loop_footer_branch
    %17 = sbr.rel target = $region3
  $region8: #{tpu_custom_call.1} parent=0 // loop_exit
    _

</llo_original>
